<compile_context>
chip_gen: v7x
topology: tpu7x:2x2x1
jax: 0.10.0
libtpu: 0.0.40
codegen_flags: <defaults>
</compile_context>

<pallas_src>
import functools

import jax
import jax.numpy as jnp
from jax import lax
from jax.experimental import pallas as pl
from jax.experimental.pallas import tpu as pltpu


# ----------------------------------------------------------------------------
# Fused (both directions in one grid pass) time-chunked layer kernel.
#   xf_ref : (Tc, Bp, F)  chunk c of the input          (forward direction)
#   xb_ref : (Tc, Bp, F)  chunk Nc-1-c of the input     (backward direction)
#   wih_ref: (2, F, H)    bf16 [Wih_f^T, Wih_b^T]
#   whh_ref: (2, H, H)    bf16 [Whh_f^T, Whh_b^T]
#   b_ref  : (2, 1, H)    f32  [b_ih_f+b_hh_f, b_ih_b+b_hh_b]
#   of_ref : (Tc, Bp, H)  forward outputs for chunk c
#   ob_ref : (Tc, Bp, H)  backward outputs for chunk Nc-1-c
#   h_scr  : (2, Bp, H)   f32 carried hidden states [h_f, h_b] (persists over chunks)
# ----------------------------------------------------------------------------
def _bd_layer_kernel(xf_ref, xb_ref, wih_ref, whh_ref, b_ref, of_ref, ob_ref,
                     h_scr, *, unroll):
    Tc, Bp, F = xf_ref.shape
    H = of_ref.shape[-1]

    @pl.when(pl.program_id(0) == 0)
    def _init():
        h_scr[...] = jnp.zeros_like(h_scr)

    # (1) Hoisted input projection (+ combined bias) for both directions of this
    # chunk: two bulk MXU matmuls, staged directly into the output refs (no proj
    # scratch).  (Tc,Bp) merge is a layout no-op since Bp is a sublane multiple.
    xf = xf_ref[...].reshape(Tc * Bp, F).astype(jnp.bfloat16)
    xb = xb_ref[...].reshape(Tc * Bp, F).astype(jnp.bfloat16)
    pf = jnp.dot(xf, wih_ref[0], preferred_element_type=jnp.float32) + b_ref[0]
    pb = jnp.dot(xb, wih_ref[1], preferred_element_type=jnp.float32) + b_ref[1]
    of_ref[...] = pf.reshape(Tc, Bp, H)
    ob_ref[...] = pb.reshape(Tc, Bp, H)

    # Hoisted loop-invariant weight loads.
    whh_f = whh_ref[0]  # (H, H) bf16
    whh_b = whh_ref[1]

    def body(t, carry):
        h_f, h_b = carry           # (Bp, H) f32 each
        tb = Tc - 1 - t            # backward direction walks its chunk in reverse
        rec_f = jnp.dot(h_f.astype(jnp.bfloat16), whh_f,
                        preferred_element_type=jnp.float32)
        rec_b = jnp.dot(h_b.astype(jnp.bfloat16), whh_b,
                        preferred_element_type=jnp.float32)
        # Read the staged projection, then overwrite the same row with the state
        # (read-before-write per index -> aliasing into the out refs is safe).
        h_f = jnp.tanh(of_ref[t] + rec_f)
        h_b = jnp.tanh(ob_ref[tb] + rec_b)
        of_ref[t] = h_f
        ob_ref[tb] = h_b
        return h_f, h_b

    h0 = (h_scr[0], h_scr[1])
    hf, hb = lax.fori_loop(0, Tc, body, h0, unroll=unroll)
    h_scr[0] = hf
    h_scr[1] = hb


def _pick_chunk(T, target):
    """Largest divisor of T that is <= target (time is never padded: padding would
    corrupt the backward recurrence's starting state)."""
    target = max(1, min(T, int(target)))
    for c in range(target, 0, -1):
        if T % c == 0:
            return c
    return T


def _vmem_limit_bytes(Tc, Bp, F, H):
    # Two x inputs + two outputs, each double-buffered by the pipeline (f32 I/O).
    io = 2 * 2 * Tc * Bp * F * 4 + 2 * 2 * Tc * Bp * H * 4
    weights = 2 * F * H * 2 + 2 * H * H * 2 + 2 * H * 4      # bf16 W, f32 bias
    scratch = 2 * Bp * H * 4
    total = io + weights + scratch
    # Generous headroom for compiler temporaries (projection vregs, casts).
    return int(min(max(2 * total, 16 << 20), 96 << 20))


def _bd_layer(x_tbf, wih, whh, b, *, time_chunk):
    """One bidirectional RNN layer. x_tbf: (T, Bp, F) f32 -> (out_f, out_b) each (T, Bp, H) f32."""
    T, Bp, F = x_tbf.shape
    H = whh.shape[-1]
    Tc = _pick_chunk(T, time_chunk)
    Nc = T // Tc

    xf_spec = pl.BlockSpec((Tc, Bp, F), lambda c: (c, 0, 0))
    xb_spec = pl.BlockSpec((Tc, Bp, F), lambda c: (Nc - 1 - c, 0, 0))
    w_spec = pl.BlockSpec((2, F, H), lambda c: (0, 0, 0))
    whh_spec = pl.BlockSpec((2, H, H), lambda c: (0, 0, 0))
    b_spec = pl.BlockSpec((2, 1, H), lambda c: (0, 0, 0))
    of_spec = pl.BlockSpec((Tc, Bp, H), lambda c: (c, 0, 0))
    ob_spec = pl.BlockSpec((Tc, Bp, H), lambda c: (Nc - 1 - c, 0, 0))

    out_f, out_b = pl.pallas_call(
        functools.partial(_bd_layer_kernel, unroll=min(8, Tc)),
        grid=(Nc,),
        in_specs=[xf_spec, xb_spec, w_spec, whh_spec, b_spec],
        out_specs=[of_spec, ob_spec],
        out_shape=[jax.ShapeDtypeStruct((T, Bp, H), jnp.float32),
                   jax.ShapeDtypeStruct((T, Bp, H), jnp.float32)],
        scratch_shapes=[pltpu.VMEM((2, Bp, H), jnp.float32)],
        compiler_params=pltpu.CompilerParams(
            dimension_semantics=("arbitrary",),  # h carries across time chunks
            vmem_limit_bytes=_vmem_limit_bytes(Tc, Bp, F, H)),
    )(x_tbf, x_tbf, wih, whh, b)
    return out_f, out_b


# ----------------------------------------------------------------------------
# Full EncoderBdRNN forward: num_layers stacked bidirectional layers.
# ----------------------------------------------------------------------------
def encoder_bdrnn_forward(x_btf, params, *, time_chunk=64):
    """x_btf: (B, T, input_size). Returns (B, T, 2*hidden_size)."""
    B, T, _ = x_btf.shape
    Bp = max(8, ((B + 7) // 8) * 8)  # pad batch to f32 sublane multiple, once

    layer_in = jnp.transpose(x_btf, (1, 0, 2)).astype(jnp.float32)  # (T, B, F)
    if Bp != B:
        layer_in = jnp.pad(layer_in, ((0, 0), (0, Bp - B), (0, 0)))

    for p in params:
        out_f, out_b = _bd_layer(layer_in, p["wih"], p["whh"], p["b"],
                                 time_chunk=time_chunk)
        layer_in = jnp.concatenate([out_f, out_b], axis=-1)  # (T, Bp, 2H)

    out = layer_in[:, :B, :]                 # drop batch padding
    return jnp.transpose(out, (1, 0, 2))     # (B, T, 2H)


# ----------------------------------------------------------------------------
# Deterministic parameter init (PyTorch nn.RNN default: U(-1/sqrt(H), 1/sqrt(H)))
# ----------------------------------------------------------------------------
def init_params(key, input_size, hidden_size, num_layers):
    H = hidden_size
    bound = 1.0 / jnp.sqrt(jnp.float32(H))
    params = []
    for layer in range(num_layers):
        in_size = input_size if layer == 0 else 2 * H
        raw = {}
        for tag in ("f", "b"):
            key, k1, k2, k3, k4 = jax.random.split(key, 5)
            raw[f"w_ih_{tag}"] = jax.random.uniform(k1, (H, in_size), jnp.float32, -bound, bound)
            raw[f"w_hh_{tag}"] = jax.random.uniform(k2, (H, H), jnp.float32, -bound, bound)
            raw[f"b_ih_{tag}"] = jax.random.uniform(k3, (H,), jnp.float32, -bound, bound)
            raw[f"b_hh_{tag}"] = jax.random.uniform(k4, (H,), jnp.float32, -bound, bound)

        # Packed kernel weights: bf16 MXU operands, f32 bias.
        wih = jnp.stack([raw["w_ih_f"].T, raw["w_ih_b"].T]).astype(jnp.bfloat16)  # (2, F, H)
        whh = jnp.stack([raw["w_hh_f"].T, raw["w_hh_b"].T]).astype(jnp.bfloat16)  # (2, H, H)
        b = jnp.stack([raw["b_ih_f"] + raw["b_hh_f"],
                       raw["b_ih_b"] + raw["b_hh_b"]]).reshape(2, 1, H)            # (2, 1, H)

        params.append({
            "wih": wih, "whh": whh, "b": b,
            # raw (PyTorch-layout) f32 weights for the pure-JAX reference
            "w_ih_f": raw["w_ih_f"], "w_hh_f": raw["w_hh_f"],
            "b_f": raw["b_ih_f"] + raw["b_hh_f"],
            "w_ih_b": raw["w_ih_b"], "w_hh_b": raw["w_hh_b"],
            "b_b": raw["b_ih_b"] + raw["b_hh_b"],
        })
    return params


# ----------------------------------------------------------------------------
# Pure-JAX reference (mirrors PyTorch nn.RNN(tanh, bidirectional, batch_first))
# ----------------------------------------------------------------------------
def reference_forward(x_btf, params):
    layer_in = jnp.transpose(x_btf, (1, 0, 2)).astype(jnp.float32)  # (T, B, F)

    def run_dir(seq, w_ih, w_hh, b):
        B = seq.shape[1]
        H = w_hh.shape[0]

        def step(h, x_t):
            h_new = jnp.tanh(x_t @ w_ih.T + h @ w_hh.T + b[None, :])
            return h_new, h_new

        _, outs = lax.scan(step, jnp.zeros((B, H), jnp.float32), seq)
        return outs

    for p in params:
        out_f = run_dir(layer_in, p["w_ih_f"], p["w_hh_f"], p["b_f"])
        out_b = run_dir(layer_in[::-1], p["w_ih_b"], p["w_hh_b"], p["b_b"])[::-1]
        layer_in = jnp.concatenate([out_f, out_b], axis=-1)
    return jnp.transpose(layer_in, (1, 0, 2))


if __name__ == "__main__":
    # Small shapes consistent with the module: x is (batch, seq, input_size)
    B, T = 2, 8
    input_size, hidden_size, num_layers = 16, 32, 2

    key = jax.random.PRNGKey(0)
    key, kx = jax.random.split(key)
    x = jax.random.normal(kx, (B, T, input_size), jnp.float32)

    params = init_params(key, input_size, hidden_size, num_layers)

    # time_chunk=4 -> 2 time chunks, exercising the chunked grid + carried h state.
    pred = encoder_bdrnn_forward(x, params, time_chunk=4)
    pred = jax.block_until_ready(pred)

    assert pred.shape == (B, T, 2 * hidden_size), pred.shape

    ref = reference_forward(x, params)
    max_err = float(jnp.max(jnp.abs(pred - ref)))
    # bf16 MXU operands (f32 accumulation) -> relaxed tolerance vs f32 reference.
    assert jnp.allclose(pred, ref, rtol=3e-2, atol=3e-2), max_err

    print("KERNEL_OK")
</pallas_src>

<mosaic_0001>
module attributes {stable_mosaic.version = 11 : i64} {
  func.func @_bd_layer_kernel(%arg0: i32, %arg1: memref<4x8x16xf32, #tpu.memory_space<vmem>>, %arg2: memref<4x8x16xf32, #tpu.memory_space<vmem>>, %arg3: memref<2x16x32xbf16, #tpu.memory_space<vmem>>, %arg4: memref<2x32x32xbf16, #tpu.memory_space<vmem>>, %arg5: memref<2x1x32xf32, #tpu.memory_space<vmem>>, %arg6: memref<4x8x32xf32, #tpu.memory_space<vmem>>, %arg7: memref<4x8x32xf32, #tpu.memory_space<vmem>>, %arg8: memref<2x8x32xf32, #tpu.memory_space<vmem>>) attributes {dimension_semantics = [#tpu.dimension_semantics<arbitrary>], iteration_bounds = array<i64: 2>, scalar_prefetch = 0 : i64, scratch_operands = 1 : i64, tpu.core_type = #tpu.core_type<tc>, window_params = [{transform_indices = @transform_0, window_bounds = array<i64: 4, 8, 16>}, {transform_indices = @transform_1, window_bounds = array<i64: 4, 8, 16>}, {pipeline_mode = #tpu.pipeline_mode<synchronous>, transform_indices = @transform_2, window_bounds = array<i64: 2, 16, 32>}, {pipeline_mode = #tpu.pipeline_mode<synchronous>, transform_indices = @transform_3, window_bounds = array<i64: 2, 32, 32>}, {pipeline_mode = #tpu.pipeline_mode<synchronous>, transform_indices = @transform_4, window_bounds = array<i64: 2, 1, 32>}, {transform_indices = @transform_5, window_bounds = array<i64: 4, 8, 32>}, {transform_indices = @transform_6, window_bounds = array<i64: 4, 8, 32>}]} {
    %c0_i32 = arith.constant 0 : i32
    %0 = arith.cmpi eq, %arg0, %c0_i32 : i32
    %1 = arith.extui %0 : i1 to i32
    %c0_i32_0 = arith.constant 0 : i32
    %2 = arith.cmpi ne, %1, %c0_i32_0 : i32
    scf.if %2 {
      %cst_87 = arith.constant 0.000000e+00 : f32
      %133 = vector.broadcast %cst_87 : f32 to vector<2x8x32xf32>
      %c0_88 = arith.constant 0 : index
      %c0_89 = arith.constant 0 : index
      %c0_90 = arith.constant 0 : index
      %134 = vector.load %arg8[%c0_88, %c0_89, %c0_90] : memref<2x8x32xf32, #tpu.memory_space<vmem>>, vector<2x8x32xf32>
      tpu.vector_store %arg8[%c0_88, %c0_89, %c0_90], %133 {strides = array<i32>} : memref<2x8x32xf32, #tpu.memory_space<vmem>>, vector<2x8x32xf32>,
    } else {
    }
    %c0 = arith.constant 0 : index
    %c0_1 = arith.constant 0 : index
    %c0_2 = arith.constant 0 : index
    %3 = vector.load %arg1[%c0, %c0_1, %c0_2] : memref<4x8x16xf32, #tpu.memory_space<vmem>>, vector<4x8x16xf32>
    %4 = vector.shape_cast %3 : vector<4x8x16xf32> to vector<32x16xf32>
    %5 = arith.truncf %4 : vector<32x16xf32> to vector<32x16xbf16>
    %c0_3 = arith.constant 0 : index
    %c0_4 = arith.constant 0 : index
    %c0_5 = arith.constant 0 : index
    %6 = vector.load %arg2[%c0_3, %c0_4, %c0_5] : memref<4x8x16xf32, #tpu.memory_space<vmem>>, vector<4x8x16xf32>
    %7 = vector.shape_cast %6 : vector<4x8x16xf32> to vector<32x16xf32>
    %8 = arith.truncf %7 : vector<32x16xf32> to vector<32x16xbf16>
    %c0_6 = arith.constant 0 : index
    %c0_7 = arith.constant 0 : index
    %c0_8 = arith.constant 0 : index
    %9 = vector.load %arg3[%c0_6, %c0_7, %c0_8] : memref<2x16x32xbf16, #tpu.memory_space<vmem>>, vector<1x16x32xbf16>
    %10 = vector.shape_cast %9 : vector<1x16x32xbf16> to vector<16x32xbf16>
    %cst = arith.constant dense<0.000000e+00> : vector<32x32xf32>
    %11 = tpu.matmul %5, %10, %cst {dimension_numbers = #tpu.dot_dimension_numbers<[1], [0], [0], [1], [0, 0, 1, 1], [], []>} : vector<32x16xbf16>, vector<16x32xbf16>, vector<32x32xf32> -> vector<32x32xf32>
    %c0_9 = arith.constant 0 : index
    %c0_10 = arith.constant 0 : index
    %c0_11 = arith.constant 0 : index
    %12 = vector.load %arg5[%c0_9, %c0_10, %c0_11] : memref<2x1x32xf32, #tpu.memory_space<vmem>>, vector<1x1x32xf32>
    %13 = vector.shape_cast %12 : vector<1x1x32xf32> to vector<1x32xf32>
    %14 = vector.broadcast %13 : vector<1x32xf32> to vector<32x32xf32>
    %15 = arith.addf %11, %14 : vector<32x32xf32>
    %c1 = arith.constant 1 : index
    %c0_12 = arith.constant 0 : index
    %c0_13 = arith.constant 0 : index
    %16 = vector.load %arg3[%c1, %c0_12, %c0_13] : memref<2x16x32xbf16, #tpu.memory_space<vmem>>, vector<1x16x32xbf16>
    %17 = vector.shape_cast %16 : vector<1x16x32xbf16> to vector<16x32xbf16>
    %cst_14 = arith.constant dense<0.000000e+00> : vector<32x32xf32>
    %18 = tpu.matmul %8, %17, %cst_14 {dimension_numbers = #tpu.dot_dimension_numbers<[1], [0], [0], [1], [0, 0, 1, 1], [], []>} : vector<32x16xbf16>, vector<16x32xbf16>, vector<32x32xf32> -> vector<32x32xf32>
    %c1_15 = arith.constant 1 : index
    %c0_16 = arith.constant 0 : index
    %c0_17 = arith.constant 0 : index
    %19 = vector.load %arg5[%c1_15, %c0_16, %c0_17] : memref<2x1x32xf32, #tpu.memory_space<vmem>>, vector<1x1x32xf32>
    %20 = vector.shape_cast %19 : vector<1x1x32xf32> to vector<1x32xf32>
    %21 = vector.broadcast %20 : vector<1x32xf32> to vector<32x32xf32>
    %22 = arith.addf %18, %21 : vector<32x32xf32>
    %23 = vector.shape_cast %15 : vector<32x32xf32> to vector<4x8x32xf32>
    %c0_18 = arith.constant 0 : index
    %c0_19 = arith.constant 0 : index
    %c0_20 = arith.constant 0 : index
    %24 = vector.load %arg6[%c0_18, %c0_19, %c0_20] : memref<4x8x32xf32, #tpu.memory_space<vmem>>, vector<4x8x32xf32>
    tpu.vector_store %arg6[%c0_18, %c0_19, %c0_20], %23 {strides = array<i32>} : memref<4x8x32xf32, #tpu.memory_space<vmem>>, vector<4x8x32xf32>,
    %25 = vector.shape_cast %22 : vector<32x32xf32> to vector<4x8x32xf32>
    %c0_21 = arith.constant 0 : index
    %c0_22 = arith.constant 0 : index
    %c0_23 = arith.constant 0 : index
    %26 = vector.load %arg7[%c0_21, %c0_22, %c0_23] : memref<4x8x32xf32, #tpu.memory_space<vmem>>, vector<4x8x32xf32>
    tpu.vector_store %arg7[%c0_21, %c0_22, %c0_23], %25 {strides = array<i32>} : memref<4x8x32xf32, #tpu.memory_space<vmem>>, vector<4x8x32xf32>,
    %c0_24 = arith.constant 0 : index
    %c0_25 = arith.constant 0 : index
    %c0_26 = arith.constant 0 : index
    %27 = vector.load %arg4[%c0_24, %c0_25, %c0_26] : memref<2x32x32xbf16, #tpu.memory_space<vmem>>, vector<1x32x32xbf16>
    %28 = vector.shape_cast %27 : vector<1x32x32xbf16> to vector<32x32xbf16>
    %c1_27 = arith.constant 1 : index
    %c0_28 = arith.constant 0 : index
    %c0_29 = arith.constant 0 : index
    %29 = vector.load %arg4[%c1_27, %c0_28, %c0_29] : memref<2x32x32xbf16, #tpu.memory_space<vmem>>, vector<1x32x32xbf16>
    %30 = vector.shape_cast %29 : vector<1x32x32xbf16> to vector<32x32xbf16>
    %c0_30 = arith.constant 0 : index
    %c0_31 = arith.constant 0 : index
    %c0_32 = arith.constant 0 : index
    %31 = vector.load %arg8[%c0_30, %c0_31, %c0_32] : memref<2x8x32xf32, #tpu.memory_space<vmem>>, vector<1x8x32xf32>
    %32 = vector.shape_cast %31 : vector<1x8x32xf32> to vector<8x32xf32>
    %c1_33 = arith.constant 1 : index
    %c0_34 = arith.constant 0 : index
    %c0_35 = arith.constant 0 : index
    %33 = vector.load %arg8[%c1_33, %c0_34, %c0_35] : memref<2x8x32xf32, #tpu.memory_space<vmem>>, vector<1x8x32xf32>
    %34 = vector.shape_cast %33 : vector<1x8x32xf32> to vector<8x32xf32>
    %c0_i32_36 = arith.constant 0 : i32
    %c3_i32 = arith.constant 3 : i32
    %35 = arith.subi %c3_i32, %c0_i32_36 : i32
    %36 = arith.truncf %32 : vector<8x32xf32> to vector<8x32xbf16>
    %cst_37 = arith.constant dense<0.000000e+00> : vector<8x32xf32>
    %37 = tpu.matmul %36, %28, %cst_37 {dimension_numbers = #tpu.dot_dimension_numbers<[1], [0], [0], [1], [0, 0, 1, 1], [], []>} : vector<8x32xbf16>, vector<32x32xbf16>, vector<8x32xf32> -> vector<8x32xf32>
    %38 = arith.truncf %34 : vector<8x32xf32> to vector<8x32xbf16>
    %cst_38 = arith.constant dense<0.000000e+00> : vector<8x32xf32>
    %39 = tpu.matmul %38, %30, %cst_38 {dimension_numbers = #tpu.dot_dimension_numbers<[1], [0], [0], [1], [0, 0, 1, 1], [], []>} : vector<8x32xbf16>, vector<32x32xbf16>, vector<8x32xf32> -> vector<8x32xf32>
    %40 = arith.index_cast %c0_i32_36 : i32 to index
    %c0_39 = arith.constant 0 : index
    %c0_40 = arith.constant 0 : index
    %41 = vector.load %arg6[%40, %c0_39, %c0_40] : memref<4x8x32xf32, #tpu.memory_space<vmem>>, vector<1x8x32xf32>
    %42 = vector.shape_cast %41 : vector<1x8x32xf32> to vector<8x32xf32>
    %43 = arith.addf %42, %37 : vector<8x32xf32>
    %44 = math.tanh %43 : vector<8x32xf32>
    %45 = arith.index_cast %35 : i32 to index
    %c0_41 = arith.constant 0 : index
    %c0_42 = arith.constant 0 : index
    %46 = vector.load %arg7[%45, %c0_41, %c0_42] : memref<4x8x32xf32, #tpu.memory_space<vmem>>, vector<1x8x32xf32>
    %47 = vector.shape_cast %46 : vector<1x8x32xf32> to vector<8x32xf32>
    %48 = arith.addf %47, %39 : vector<8x32xf32>
    %49 = math.tanh %48 : vector<8x32xf32>
    %50 = arith.index_cast %c0_i32_36 : i32 to index
    %c0_43 = arith.constant 0 : index
    %c0_44 = arith.constant 0 : index
    %51 = vector.load %arg6[%50, %c0_43, %c0_44] : memref<4x8x32xf32, #tpu.memory_space<vmem>>, vector<1x8x32xf32>
    %52 = vector.shape_cast %51 : vector<1x8x32xf32> to vector<8x32xf32>
    %53 = vector.shape_cast %44 : vector<8x32xf32> to vector<1x8x32xf32>
    tpu.vector_store %arg6[%50, %c0_43, %c0_44], %53 {strides = array<i32>} : memref<4x8x32xf32, #tpu.memory_space<vmem>>, vector<1x8x32xf32>,
    %54 = arith.index_cast %35 : i32 to index
    %c0_45 = arith.constant 0 : index
    %c0_46 = arith.constant 0 : index
    %55 = vector.load %arg7[%54, %c0_45, %c0_46] : memref<4x8x32xf32, #tpu.memory_space<vmem>>, vector<1x8x32xf32>
    %56 = vector.shape_cast %55 : vector<1x8x32xf32> to vector<8x32xf32>
    %57 = vector.shape_cast %49 : vector<8x32xf32> to vector<1x8x32xf32>
    tpu.vector_store %arg7[%54, %c0_45, %c0_46], %57 {strides = array<i32>} : memref<4x8x32xf32, #tpu.memory_space<vmem>>, vector<1x8x32xf32>,
    %c1_i32 = arith.constant 1 : i32
    %c3_i32_47 = arith.constant 3 : i32
    %58 = arith.subi %c3_i32_47, %c1_i32 : i32
    %59 = arith.truncf %44 : vector<8x32xf32> to vector<8x32xbf16>
    %cst_48 = arith.constant dense<0.000000e+00> : vector<8x32xf32>
    %60 = tpu.matmul %59, %28, %cst_48 {dimension_numbers = #tpu.dot_dimension_numbers<[1], [0], [0], [1], [0, 0, 1, 1], [], []>} : vector<8x32xbf16>, vector<32x32xbf16>, vector<8x32xf32> -> vector<8x32xf32>
    %61 = arith.truncf %49 : vector<8x32xf32> to vector<8x32xbf16>
    %cst_49 = arith.constant dense<0.000000e+00> : vector<8x32xf32>
    %62 = tpu.matmul %61, %30, %cst_49 {dimension_numbers = #tpu.dot_dimension_numbers<[1], [0], [0], [1], [0, 0, 1, 1], [], []>} : vector<8x32xbf16>, vector<32x32xbf16>, vector<8x32xf32> -> vector<8x32xf32>
    %63 = arith.index_cast %c1_i32 : i32 to index
    %c0_50 = arith.constant 0 : index
    %c0_51 = arith.constant 0 : index
    %64 = vector.load %arg6[%63, %c0_50, %c0_51] : memref<4x8x32xf32, #tpu.memory_space<vmem>>, vector<1x8x32xf32>
    %65 = vector.shape_cast %64 : vector<1x8x32xf32> to vector<8x32xf32>
    %66 = arith.addf %65, %60 : vector<8x32xf32>
    %67 = math.tanh %66 : vector<8x32xf32>
    %68 = arith.index_cast %58 : i32 to index
    %c0_52 = arith.constant 0 : index
    %c0_53 = arith.constant 0 : index
    %69 = vector.load %arg7[%68, %c0_52, %c0_53] : memref<4x8x32xf32, #tpu.memory_space<vmem>>, vector<1x8x32xf32>
    %70 = vector.shape_cast %69 : vector<1x8x32xf32> to vector<8x32xf32>
    %71 = arith.addf %70, %62 : vector<8x32xf32>
    %72 = math.tanh %71 : vector<8x32xf32>
    %73 = arith.index_cast %c1_i32 : i32 to index
    %c0_54 = arith.constant 0 : index
    %c0_55 = arith.constant 0 : index
    %74 = vector.load %arg6[%73, %c0_54, %c0_55] : memref<4x8x32xf32, #tpu.memory_space<vmem>>, vector<1x8x32xf32>
    %75 = vector.shape_cast %74 : vector<1x8x32xf32> to vector<8x32xf32>
    %76 = vector.shape_cast %67 : vector<8x32xf32> to vector<1x8x32xf32>
    tpu.vector_store %arg6[%73, %c0_54, %c0_55], %76 {strides = array<i32>} : memref<4x8x32xf32, #tpu.memory_space<vmem>>, vector<1x8x32xf32>,
    %77 = arith.index_cast %58 : i32 to index
    %c0_56 = arith.constant 0 : index
    %c0_57 = arith.constant 0 : index
    %78 = vector.load %arg7[%77, %c0_56, %c0_57] : memref<4x8x32xf32, #tpu.memory_space<vmem>>, vector<1x8x32xf32>
    %79 = vector.shape_cast %78 : vector<1x8x32xf32> to vector<8x32xf32>
    %80 = vector.shape_cast %72 : vector<8x32xf32> to vector<1x8x32xf32>
    tpu.vector_store %arg7[%77, %c0_56, %c0_57], %80 {strides = array<i32>} : memref<4x8x32xf32, #tpu.memory_space<vmem>>, vector<1x8x32xf32>,
    %c2_i32 = arith.constant 2 : i32
    %c3_i32_58 = arith.constant 3 : i32
    %81 = arith.subi %c3_i32_58, %c2_i32 : i32
    %82 = arith.truncf %67 : vector<8x32xf32> to vector<8x32xbf16>
    %cst_59 = arith.constant dense<0.000000e+00> : vector<8x32xf32>
    %83 = tpu.matmul %82, %28, %cst_59 {dimension_numbers = #tpu.dot_dimension_numbers<[1], [0], [0], [1], [0, 0, 1, 1], [], []>} : vector<8x32xbf16>, vector<32x32xbf16>, vector<8x32xf32> -> vector<8x32xf32>
    %84 = arith.truncf %72 : vector<8x32xf32> to vector<8x32xbf16>
    %cst_60 = arith.constant dense<0.000000e+00> : vector<8x32xf32>
    %85 = tpu.matmul %84, %30, %cst_60 {dimension_numbers = #tpu.dot_dimension_numbers<[1], [0], [0], [1], [0, 0, 1, 1], [], []>} : vector<8x32xbf16>, vector<32x32xbf16>, vector<8x32xf32> -> vector<8x32xf32>
    %86 = arith.index_cast %c2_i32 : i32 to index
    %c0_61 = arith.constant 0 : index
    %c0_62 = arith.constant 0 : index
    %87 = vector.load %arg6[%86, %c0_61, %c0_62] : memref<4x8x32xf32, #tpu.memory_space<vmem>>, vector<1x8x32xf32>
    %88 = vector.shape_cast %87 : vector<1x8x32xf32> to vector<8x32xf32>
    %89 = arith.addf %88, %83 : vector<8x32xf32>
    %90 = math.tanh %89 : vector<8x32xf32>
    %91 = arith.index_cast %81 : i32 to index
    %c0_63 = arith.constant 0 : index
    %c0_64 = arith.constant 0 : index
    %92 = vector.load %arg7[%91, %c0_63, %c0_64] : memref<4x8x32xf32, #tpu.memory_space<vmem>>, vector<1x8x32xf32>
    %93 = vector.shape_cast %92 : vector<1x8x32xf32> to vector<8x32xf32>
    %94 = arith.addf %93, %85 : vector<8x32xf32>
    %95 = math.tanh %94 : vector<8x32xf32>
    %96 = arith.index_cast %c2_i32 : i32 to index
    %c0_65 = arith.constant 0 : index
    %c0_66 = arith.constant 0 : index
    %97 = vector.load %arg6[%96, %c0_65, %c0_66] : memref<4x8x32xf32, #tpu.memory_space<vmem>>, vector<1x8x32xf32>
    %98 = vector.shape_cast %97 : vector<1x8x32xf32> to vector<8x32xf32>
    %99 = vector.shape_cast %90 : vector<8x32xf32> to vector<1x8x32xf32>
    tpu.vector_store %arg6[%96, %c0_65, %c0_66], %99 {strides = array<i32>} : memref<4x8x32xf32, #tpu.memory_space<vmem>>, vector<1x8x32xf32>,
    %100 = arith.index_cast %81 : i32 to index
    %c0_67 = arith.constant 0 : index
    %c0_68 = arith.constant 0 : index
    %101 = vector.load %arg7[%100, %c0_67, %c0_68] : memref<4x8x32xf32, #tpu.memory_space<vmem>>, vector<1x8x32xf32>
    %102 = vector.shape_cast %101 : vector<1x8x32xf32> to vector<8x32xf32>
    %103 = vector.shape_cast %95 : vector<8x32xf32> to vector<1x8x32xf32>
    tpu.vector_store %arg7[%100, %c0_67, %c0_68], %103 {strides = array<i32>} : memref<4x8x32xf32, #tpu.memory_space<vmem>>, vector<1x8x32xf32>,
    %c3_i32_69 = arith.constant 3 : i32
    %c3_i32_70 = arith.constant 3 : i32
    %104 = arith.subi %c3_i32_70, %c3_i32_69 : i32
    %105 = arith.truncf %90 : vector<8x32xf32> to vector<8x32xbf16>
    %cst_71 = arith.constant dense<0.000000e+00> : vector<8x32xf32>
    %106 = tpu.matmul %105, %28, %cst_71 {dimension_numbers = #tpu.dot_dimension_numbers<[1], [0], [0], [1], [0, 0, 1, 1], [], []>} : vector<8x32xbf16>, vector<32x32xbf16>, vector<8x32xf32> -> vector<8x32xf32>
    %107 = arith.truncf %95 : vector<8x32xf32> to vector<8x32xbf16>
    %cst_72 = arith.constant dense<0.000000e+00> : vector<8x32xf32>
    %108 = tpu.matmul %107, %30, %cst_72 {dimension_numbers = #tpu.dot_dimension_numbers<[1], [0], [0], [1], [0, 0, 1, 1], [], []>} : vector<8x32xbf16>, vector<32x32xbf16>, vector<8x32xf32> -> vector<8x32xf32>
    %109 = arith.index_cast %c3_i32_69 : i32 to index
    %c0_73 = arith.constant 0 : index
    %c0_74 = arith.constant 0 : index
    %110 = vector.load %arg6[%109, %c0_73, %c0_74] : memref<4x8x32xf32, #tpu.memory_space<vmem>>, vector<1x8x32xf32>
    %111 = vector.shape_cast %110 : vector<1x8x32xf32> to vector<8x32xf32>
    %112 = arith.addf %111, %106 : vector<8x32xf32>
    %113 = math.tanh %112 : vector<8x32xf32>
    %114 = arith.index_cast %104 : i32 to index
    %c0_75 = arith.constant 0 : index
    %c0_76 = arith.constant 0 : index
    %115 = vector.load %arg7[%114, %c0_75, %c0_76] : memref<4x8x32xf32, #tpu.memory_space<vmem>>, vector<1x8x32xf32>
    %116 = vector.shape_cast %115 : vector<1x8x32xf32> to vector<8x32xf32>
    %117 = arith.addf %116, %108 : vector<8x32xf32>
    %118 = math.tanh %117 : vector<8x32xf32>
    %119 = arith.index_cast %c3_i32_69 : i32 to index
    %c0_77 = arith.constant 0 : index
    %c0_78 = arith.constant 0 : index
    %120 = vector.load %arg6[%119, %c0_77, %c0_78] : memref<4x8x32xf32, #tpu.memory_space<vmem>>, vector<1x8x32xf32>
    %121 = vector.shape_cast %120 : vector<1x8x32xf32> to vector<8x32xf32>
    %122 = vector.shape_cast %113 : vector<8x32xf32> to vector<1x8x32xf32>
    tpu.vector_store %arg6[%119, %c0_77, %c0_78], %122 {strides = array<i32>} : memref<4x8x32xf32, #tpu.memory_space<vmem>>, vector<1x8x32xf32>,
    %123 = arith.index_cast %104 : i32 to index
    %c0_79 = arith.constant 0 : index
    %c0_80 = arith.constant 0 : index
    %124 = vector.load %arg7[%123, %c0_79, %c0_80] : memref<4x8x32xf32, #tpu.memory_space<vmem>>, vector<1x8x32xf32>
    %125 = vector.shape_cast %124 : vector<1x8x32xf32> to vector<8x32xf32>
    %126 = vector.shape_cast %118 : vector<8x32xf32> to vector<1x8x32xf32>
    tpu.vector_store %arg7[%123, %c0_79, %c0_80], %126 {strides = array<i32>} : memref<4x8x32xf32, #tpu.memory_space<vmem>>, vector<1x8x32xf32>,
    %c4_i32 = arith.constant 4 : i32
    %c0_81 = arith.constant 0 : index
    %c0_82 = arith.constant 0 : index
    %c0_83 = arith.constant 0 : index
    %127 = vector.load %arg8[%c0_81, %c0_82, %c0_83] : memref<2x8x32xf32, #tpu.memory_space<vmem>>, vector<1x8x32xf32>
    %128 = vector.shape_cast %127 : vector<1x8x32xf32> to vector<8x32xf32>
    %129 = vector.shape_cast %113 : vector<8x32xf32> to vector<1x8x32xf32>
    tpu.vector_store %arg8[%c0_81, %c0_82, %c0_83], %129 {strides = array<i32>} : memref<2x8x32xf32, #tpu.memory_space<vmem>>, vector<1x8x32xf32>,
    %c1_84 = arith.constant 1 : index
    %c0_85 = arith.constant 0 : index
    %c0_86 = arith.constant 0 : index
    %130 = vector.load %arg8[%c1_84, %c0_85, %c0_86] : memref<2x8x32xf32, #tpu.memory_space<vmem>>, vector<1x8x32xf32>
    %131 = vector.shape_cast %130 : vector<1x8x32xf32> to vector<8x32xf32>
    %132 = vector.shape_cast %118 : vector<8x32xf32> to vector<1x8x32xf32>
    tpu.vector_store %arg8[%c1_84, %c0_85, %c0_86], %132 {strides = array<i32>} : memref<2x8x32xf32, #tpu.memory_space<vmem>>, vector<1x8x32xf32>,
    return
  }
  func.func @transform_0(%arg0: i32) -> (i32, i32, i32) {
    %c0_i32 = arith.constant 0 : i32
    %c0_i32_0 = arith.constant 0 : i32
    %c0_i32_1 = arith.constant 0 : i32
    return %arg0, %c0_i32, %c0_i32_0 : i32, i32, i32
  }
  func.func @transform_1(%arg0: i32) -> (i32, i32, i32) {
    %c1_i32 = arith.constant 1 : i32
    %0 = arith.subi %c1_i32, %arg0 : i32
    %c0_i32 = arith.constant 0 : i32
    %c0_i32_0 = arith.constant 0 : i32
    %c0_i32_1 = arith.constant 0 : i32
    return %0, %c0_i32, %c0_i32_0 : i32, i32, i32
  }
  func.func @transform_2(%arg0: i32) -> (i32, i32, i32) {
    %c0_i32 = arith.constant 0 : i32
    %c0_i32_0 = arith.constant 0 : i32
    %c0_i32_1 = arith.constant 0 : i32
    %c0_i32_2 = arith.constant 0 : i32
    return %c0_i32, %c0_i32_0, %c0_i32_1 : i32, i32, i32
  }
  func.func @transform_3(%arg0: i32) -> (i32, i32, i32) {
    %c0_i32 = arith.constant 0 : i32
    %c0_i32_0 = arith.constant 0 : i32
    %c0_i32_1 = arith.constant 0 : i32
    %c0_i32_2 = arith.constant 0 : i32
    return %c0_i32, %c0_i32_0, %c0_i32_1 : i32, i32, i32
  }
  func.func @transform_4(%arg0: i32) -> (i32, i32, i32) {
    %c0_i32 = arith.constant 0 : i32
    %c0_i32_0 = arith.constant 0 : i32
    %c0_i32_1 = arith.constant 0 : i32
    %c0_i32_2 = arith.constant 0 : i32
    return %c0_i32, %c0_i32_0, %c0_i32_1 : i32, i32, i32
  }
  func.func @transform_5(%arg0: i32) -> (i32, i32, i32) {
    %c0_i32 = arith.constant 0 : i32
    %c0_i32_0 = arith.constant 0 : i32
    %c0_i32_1 = arith.constant 0 : i32
    return %arg0, %c0_i32, %c0_i32_0 : i32, i32, i32
  }
  func.func @transform_6(%arg0: i32) -> (i32, i32, i32) {
    %c1_i32 = arith.constant 1 : i32
    %0 = arith.subi %c1_i32, %arg0 : i32
    %c0_i32 = arith.constant 0 : i32
    %c0_i32_0 = arith.constant 0 : i32
    %c0_i32_1 = arith.constant 0 : i32
    return %0, %c0_i32, %c0_i32_0 : i32, i32, i32
  }
}

</mosaic_0001>

<llo_original>
// kernel: tpu_custom_call.1
$region0: #{tpu_custom_call.1}
  #allocation0 [shape = 'u32[]', space=smem, size = 0x4, offset = 0x4, fixed_abs, tag = 'smem constant byte address 0x4 - core index']
  #allocation1 [shape = 'u32[144,128]{1,0:T(1,128)}', space=vmem, size = 0x12000, scoped, tag = 'internal scratch']
  #allocation2 [shape = 'f32[2,8,32]{2,1,0:T(8,128)}', space=vmem, size = 0x2000, scoped, tag = 'scratch operand']
  %s0 = inlined_call_operand.hbm [shape: f32[8,8,16], index: 0, kind: input, shape index: {}]
  %s1 = inlined_call_operand.hbm [shape: f32[8,8,16], index: 1, kind: input, shape index: {}]
  %s2 = inlined_call_operand.hbm [shape: bf16[2,16,32], index: 2, kind: input, shape index: {}]
  %s3 = inlined_call_operand.hbm [shape: bf16[2,32,32], index: 3, kind: input, shape index: {}]
  %s4 = inlined_call_operand.vmem [shape: f32[2,1,32], index: 4, kind: input, shape index: {}]
  %s5 = inlined_call_operand.hbm [shape: f32[8,8,32], index: 5, kind: output, shape index: {0}]
  %s6 = inlined_call_operand.hbm [shape: f32[8,8,32], index: 6, kind: output, shape index: {1}]
  %7 = xla_tuple %s5, %s6
  %s8 = sld [smem:[#allocation0]]
  $region81: #{tpu_custom_call.1} parent=0
    _
  %s10 = ssub.s32 1, %s8
  %s11 = scalar_select 0, %s10, %s8
  $region1: #{tpu_custom_call.1} parent=0
    #allocation3 [shape = 'u8[32768]{0}', space=vmem, size = 0x8000, scoped, tag = 'input window, operand 0']
    #allocation4 [shape = 's32[2]{0}', space=sflag, size = 0x8, scoped, tag = 'scoped memory for tpu_custom_call.1']
    #allocation5 [shape = 's32[2]{0}', space=sflag, size = 0x8, scoped, tag = 'scoped memory for tpu_custom_call.1']
    #allocation6 [shape = 'u8[32768]{0}', space=vmem, size = 0x8000, scoped, tag = 'input window, operand 1']
    #allocation7 [shape = 's32[2]{0}', space=sflag, size = 0x8, scoped, tag = 'scoped memory for tpu_custom_call.1']
    #allocation8 [shape = 'u8[8192]{0}', space=vmem, size = 0x2000, scoped, tag = 'input window, operand 2, single buffered']
    #allocation9 [shape = 'u8[16384]{0}', space=vmem, size = 0x4000, scoped, tag = 'input window, operand 3, single buffered']
    #allocation10 [shape = 's32[1]{0}', space=sflag, size = 0x4, scoped, tag = 'scoped memory for tpu_custom_call.1']
    #allocation11 [shape = 'u8[32768]{0}', space=vmem, size = 0x8000, scoped, tag = 'output window, operand 0']
    #allocation12 [shape = 'u8[32768]{0}', space=vmem, size = 0x8000, scoped, tag = 'output window, operand 1']
    #allocation13 [shape = 's32[2]{0}', space=sflag, size = 0x8, scoped, tag = 'scoped memory for tpu_custom_call.1']
    %12 = vsyncpa [#allocation4], 0
    %s13 = scalar_lea.sflag [#allocation4], 1
    %14 = vsyncpa %s13, 0
    %15 = vsyncpa [#allocation7], 0
    %s16 = scalar_lea.sflag [#allocation7], 1
    %17 = vsyncpa %s16, 0
    %18 = vsyncpa [#allocation10], 0
    %19 = vsyncpa [#allocation5], 0
    %s20 = scalar_lea.sflag [#allocation5], 1
    %21 = vsyncpa %s20, 0
    %22 = vsyncpa [#allocation13], 0
    %s23 = scalar_lea.sflag [#allocation13], 1
    %24 = vsyncpa %s23, 0
    loop: start=0, step=1, limit=4
    $region2: #{tpu_custom_call.1} parent=1 // loop_pre_header
      _
    $region3: #{tpu_custom_call.1} parent=1 // loop_header
      %s26 = sphi 0, %s30
      %p27 = scmp.ge.s32.totalorder %s26, 4
      %s36 = sphi 0, %s38
      %s39 = sphi 0, %s36
      %s40 = sphi 0, %s39
      %s56 = sphi 0, %s40
      %s64 = sphi 0, %s66
      %s67 = sphi 0, %s64
      %s68 = sphi 0, %s67
      %s84 = sphi 0, %s68
      %s88 = sphi 0, %s88
      %s90 = sphi 0, %s88
      %s91 = sphi 0, %s90
      %s105 = sphi 0, %s91
      %s109 = sphi 0, %s109
      %s111 = sphi 0, %s109
      %s112 = sphi 0, %s111
      %s126 = sphi 0, %s112
      %s130 = sphi 0, %s130
      %s132 = sphi 0, %s130
      %s133 = sphi 0, %s132
      %s147 = sphi 0, %s133
      %s153 = sphi 0, %s155
      %s156 = sphi 0, %s153
      %s157 = sphi 0, %s156
      %s173 = sphi 0, %s157
      %s181 = sphi 0, %s183
      %s184 = sphi 0, %s181
      %s185 = sphi 0, %s184
      %s201 = sphi 0, %s185
    $region4: #{tpu_custom_call.1} parent=1 // loop_header_branch
      %29 = sbr.rel (%p27) target = $region8
    $region5: #{tpu_custom_call.1} parent=1 // loop_body
      %s31 = ssub.s32 %s26, 1
      %s32 = ssub.s32 %s26, 2
      %s33 = sadd.s32 %s26, 1
      %s34 = ssub.s32 %s26, %s33
      %p35 = scmp.eq.s32.totalorder %s34, 0
      %s37 = sadd.s32 %s36, 1
      %s38 = scalar_select %p35, %s36, %s37
      %p41 = pneg %p35
      %p42 = scmp.eq.s32.totalorder %s26, 1
      %p43 = por %p41, %p42
      %p44 = scmp.ne.s32.totalorder %s36, %s39
      %p45 = scmp.eq.s32.totalorder %s26, 0
      %p46 = por %p44, %p45
      %p47 = scmp.ne.s32.totalorder %s36, %s39
      %p48 = scmp.eq.s32.totalorder %s31, 1
      %p49 = por %p47, %p48
      %p50 = scmp.ne.s32.totalorder %s39, %s40
      %p51 = scmp.eq.s32.totalorder %s31, 0
      %p52 = por %p50, %p51
      %p53 = scmp.ne.s32.totalorder %s39, %s40
      %p54 = scmp.eq.s32.totalorder %s32, 1
      %p55 = por %p53, %p54
      %p57 = scmp.ne.s32.totalorder %s40, %s56
      %p58 = scmp.eq.s32.totalorder %s32, 0
      %p59 = por %p57, %p58
      %s60 = ssub.s32 1, %s26
      %s61 = ssub.s32 1, %s33
      %s62 = ssub.s32 %s60, %s61
      %p63 = scmp.eq.s32.totalorder %s62, 0
      %s65 = sadd.s32 %s64, 1
      %s66 = scalar_select %p63, %s64, %s65
      %p69 = pneg %p63
      %p70 = scmp.eq.s32.totalorder %s26, 1
      %p71 = por %p69, %p70
      %p72 = scmp.ne.s32.totalorder %s64, %s67
      %p73 = scmp.eq.s32.totalorder %s26, 0
      %p74 = por %p72, %p73
      %p75 = scmp.ne.s32.totalorder %s64, %s67
      %p76 = scmp.eq.s32.totalorder %s31, 1
      %p77 = por %p75, %p76
      %p78 = scmp.ne.s32.totalorder %s67, %s68
      %p79 = scmp.eq.s32.totalorder %s31, 0
      %p80 = por %p78, %p79
      %p81 = scmp.ne.s32.totalorder %s67, %s68
      %p82 = scmp.eq.s32.totalorder %s32, 1
      %p83 = por %p81, %p82
      %p85 = scmp.ne.s32.totalorder %s68, %s84
      %p86 = scmp.eq.s32.totalorder %s32, 0
      %p87 = por %p85, %p86
      %s89 = sadd.s32 %s88, 1
      %p92 = scmp.eq.s32.totalorder %s26, 1
      %p93 = scmp.ne.s32.totalorder %s88, %s90
      %p94 = scmp.eq.s32.totalorder %s26, 0
      %p95 = por %p93, %p94
      %p96 = scmp.ne.s32.totalorder %s88, %s90
      %p97 = scmp.eq.s32.totalorder %s31, 1
      %p98 = por %p96, %p97
      %p99 = scmp.ne.s32.totalorder %s90, %s91
      %p100 = scmp.eq.s32.totalorder %s31, 0
      %p101 = por %p99, %p100
      %p102 = scmp.ne.s32.totalorder %s90, %s91
      %p103 = scmp.eq.s32.totalorder %s32, 1
      %p104 = por %p102, %p103
      %p106 = scmp.ne.s32.totalorder %s91, %s105
      %p107 = scmp.eq.s32.totalorder %s32, 0
      %p108 = por %p106, %p107
      %s110 = sadd.s32 %s109, 1
      %p113 = scmp.eq.s32.totalorder %s26, 1
      %p114 = scmp.ne.s32.totalorder %s109, %s111
      %p115 = scmp.eq.s32.totalorder %s26, 0
      %p116 = por %p114, %p115
      %p117 = scmp.ne.s32.totalorder %s109, %s111
      %p118 = scmp.eq.s32.totalorder %s31, 1
      %p119 = por %p117, %p118
      %p120 = scmp.ne.s32.totalorder %s111, %s112
      %p121 = scmp.eq.s32.totalorder %s31, 0
      %p122 = por %p120, %p121
      %p123 = scmp.ne.s32.totalorder %s111, %s112
      %p124 = scmp.eq.s32.totalorder %s32, 1
      %p125 = por %p123, %p124
      %p127 = scmp.ne.s32.totalorder %s112, %s126
      %p128 = scmp.eq.s32.totalorder %s32, 0
      %p129 = por %p127, %p128
      %s131 = sadd.s32 %s130, 1
      %p134 = scmp.eq.s32.totalorder %s26, 1
      %p135 = scmp.ne.s32.totalorder %s130, %s132
      %p136 = scmp.eq.s32.totalorder %s26, 0
      %p137 = por %p135, %p136
      %p138 = scmp.ne.s32.totalorder %s130, %s132
      %p139 = scmp.eq.s32.totalorder %s31, 1
      %p140 = por %p138, %p139
      %p141 = scmp.ne.s32.totalorder %s132, %s133
      %p142 = scmp.eq.s32.totalorder %s31, 0
      %p143 = por %p141, %p142
      %p144 = scmp.ne.s32.totalorder %s132, %s133
      %p145 = scmp.eq.s32.totalorder %s32, 1
      %p146 = por %p144, %p145
      %p148 = scmp.ne.s32.totalorder %s133, %s147
      %p149 = scmp.eq.s32.totalorder %s32, 0
      %p150 = por %p148, %p149
      %s151 = ssub.s32 %s26, %s33
      %p152 = scmp.eq.s32.totalorder %s151, 0
      %s154 = sadd.s32 %s153, 1
      %s155 = scalar_select %p152, %s153, %s154
      %p158 = pneg %p152
      %p159 = scmp.eq.s32.totalorder %s26, 1
      %p160 = por %p158, %p159
      %p161 = scmp.ne.s32.totalorder %s153, %s156
      %p162 = scmp.eq.s32.totalorder %s26, 0
      %p163 = por %p161, %p162
      %p164 = scmp.ne.s32.totalorder %s153, %s156
      %p165 = scmp.eq.s32.totalorder %s31, 1
      %p166 = por %p164, %p165
      %p167 = scmp.ne.s32.totalorder %s156, %s157
      %p168 = scmp.eq.s32.totalorder %s31, 0
      %p169 = por %p167, %p168
      %p170 = scmp.ne.s32.totalorder %s156, %s157
      %p171 = scmp.eq.s32.totalorder %s32, 1
      %p172 = por %p170, %p171
      %p174 = scmp.ne.s32.totalorder %s157, %s173
      %p175 = scmp.eq.s32.totalorder %s32, 0
      %p176 = por %p174, %p175
      %s177 = ssub.s32 1, %s26
      %s178 = ssub.s32 1, %s33
      %s179 = ssub.s32 %s177, %s178
      %p180 = scmp.eq.s32.totalorder %s179, 0
      %s182 = sadd.s32 %s181, 1
      %s183 = scalar_select %p180, %s181, %s182
      %p186 = pneg %p180
      %p187 = scmp.eq.s32.totalorder %s26, 1
      %p188 = por %p186, %p187
      %p189 = scmp.ne.s32.totalorder %s181, %s184
      %p190 = scmp.eq.s32.totalorder %s26, 0
      %p191 = por %p189, %p190
      %p192 = scmp.ne.s32.totalorder %s181, %s184
      %p193 = scmp.eq.s32.totalorder %s31, 1
      %p194 = por %p192, %p193
      %p195 = scmp.ne.s32.totalorder %s184, %s185
      %p196 = scmp.eq.s32.totalorder %s31, 0
      %p197 = por %p195, %p196
      %p198 = scmp.ne.s32.totalorder %s184, %s185
      %p199 = scmp.eq.s32.totalorder %s32, 1
      %p200 = por %p198, %p199
      %p202 = scmp.ne.s32.totalorder %s185, %s201
      %p203 = scmp.eq.s32.totalorder %s32, 0
      %p204 = por %p202, %p203
      %p205 = scmp.le.s32.totalorder 1, %s26
      %p206 = scmp.lt.s32.totalorder %s26, 3
      %p207 = pnand %p205, %p206
      %p208 = pneg %p207
      // Predicated region
      $region9: #{tpu_custom_call.1} parent=5 // pred_check
        _
      $region10: #{tpu_custom_call.1} parent=5 // pred_check_branch
        %210 = sbr.rel (%p207) target = $region12
      $region11: #{tpu_custom_call.1} parent=5 // pred_region
        %s211 = ssub.s32 %s26, 1
        // Predicated region
        $region13: #{tpu_custom_call.1} parent=11 // pred_check
          %p212 = pneg %p101
        $region14: #{tpu_custom_call.1} parent=11 // pred_check_branch
          %214 = sbr.rel (%p212) target = $region16
        $region15: #{tpu_custom_call.1} parent=11 // pred_region
          %s216 = ssub.s32 256, 256
          %217 = vsyncadd [#allocation7], %s216
          %s218 = sshll.u32 [#allocation8], 4
          %s219 = int_to_ptr.vmem [resolvable:$true] %s218
          %224 = dma.hbm_to_vmem [thread:$0]  %s2, 256, %s219, [#allocation7], 64, 64, 4
        $region16: #{tpu_custom_call.1} parent=11 // pred_fallthru
          _
        // Predicated region
        $region17: #{tpu_custom_call.1} parent=11 // pred_check
          %p225 = pneg %p122
        $region18: #{tpu_custom_call.1} parent=11 // pred_check_branch
          %227 = sbr.rel (%p225) target = $region20
        $region19: #{tpu_custom_call.1} parent=11 // pred_region
          %s229 = ssub.s32 512, 512
          %230 = vsyncadd [#allocation10], %s229
          %s231 = sshll.u32 [#allocation9], 4
          %s232 = int_to_ptr.vmem [resolvable:$true] %s231
          %237 = dma.hbm_to_vmem [thread:$0]  %s3, 512, %s232, [#allocation10], 64, 64, 4
        $region20: #{tpu_custom_call.1} parent=11 // pred_fallthru
          _
        // Predicated region
        $region21: #{tpu_custom_call.1} parent=11 // pred_check
          %p238 = pneg %p143
        $region22: #{tpu_custom_call.1} parent=11 // pred_check_branch
          %240 = sbr.rel (%p238) target = $region24
        $region23: #{tpu_custom_call.1} parent=11 // pred_region
          _
        $region24: #{tpu_custom_call.1} parent=11 // pred_fallthru
          _
      $region12: #{tpu_custom_call.1} parent=5 // pred_fallthru
        _
      %p241 = scmp.lt.s32.totalorder %s26, 2
      // Predicated region
      $region25: #{tpu_custom_call.1} parent=5 // pred_check
        %p242 = pneg %p241
      $region26: #{tpu_custom_call.1} parent=5 // pred_check_branch
        %244 = sbr.rel (%p242) target = $region28
      $region27: #{tpu_custom_call.1} parent=5 // pred_region
        // Predicated region
        $region29: #{tpu_custom_call.1} parent=27 // pred_check
          %p245 = pneg %p46
        $region30: #{tpu_custom_call.1} parent=27 // pred_check_branch
          %247 = sbr.rel (%p245) target = $region32
        $region31: #{tpu_custom_call.1} parent=27 // pred_region
          %s248 = sand.u32 %s36, 1
          %s249 = scalar_lea.sflag [#allocation4], %s248
          %s250 = sand.u32 %s36, 1
          %s251 = smul.addr %s250, 32
          %s252 = scalar_lea.vmem [#allocation3], %s251
          %s253 = smul.u32 4, %s26
          %s255 = ssub.s32 512, 512
          %256 = vsyncadd %s249, %s255
          %s257 = smul.addr %s253, 128
          %s258 = scalar_lea.hbm %s0, %s257
          %s259 = sshll.u32 %s252, 4
          %s260 = int_to_ptr.vmem [resolvable:$true] %s259
          %265 = dma.hbm_to_vmem [thread:$0]  %s258, 512, %s260, %s249, 128, 128, 8
        $region32: #{tpu_custom_call.1} parent=27 // pred_fallthru
          _
        // Predicated region
        $region33: #{tpu_custom_call.1} parent=27 // pred_check
          %p266 = pneg %p74
        $region34: #{tpu_custom_call.1} parent=27 // pred_check_branch
          %268 = sbr.rel (%p266) target = $region36
        $region35: #{tpu_custom_call.1} parent=27 // pred_region
          %s269 = sand.u32 %s26, 1
          %s270 = scalar_lea.sflag [#allocation7], %s269
          %s271 = sand.u32 %s64, 1
          %s272 = smul.addr %s271, 32
          %s273 = scalar_lea.vmem [#allocation6], %s272
          %s274 = ssub.s32 1, %s26
          %s275 = smul.u32 4, %s274
          %s277 = ssub.s32 512, 512
          %278 = vsyncadd %s270, %s277
          %s279 = smul.addr %s275, 128
          %s280 = scalar_lea.hbm %s1, %s279
          %s281 = sshll.u32 %s273, 4
          %s282 = int_to_ptr.vmem [resolvable:$true] %s281
          %287 = dma.hbm_to_vmem [thread:$0]  %s280, 512, %s282, %s270, 128, 128, 8
        $region36: #{tpu_custom_call.1} parent=27 // pred_fallthru
          _
      $region28: #{tpu_custom_call.1} parent=5 // pred_fallthru
        _
      %p288 = scmp.le.s32.totalorder 1, %s26
      %p289 = scmp.lt.s32.totalorder %s26, 3
      %p290 = pnand %p288, %p289
      %p291 = pneg %p290
      // Predicated region
      $region37: #{tpu_custom_call.1} parent=5 // pred_check
        _
      $region38: #{tpu_custom_call.1} parent=5 // pred_check_branch
        %293 = sbr.rel (%p290) target = $region40
      $region39: #{tpu_custom_call.1} parent=5 // pred_region
        %s294 = ssub.s32 %s26, 1
        %s295 = sand.u32 %s39, 1
        %s296 = scalar_lea.sflag [#allocation4], %s295
        %s297 = sand.u32 %s39, 1
        %s298 = smul.addr %s297, 32
        %s299 = scalar_lea.vmem [#allocation3], %s298
        // Predicated region
        $region41: #{tpu_custom_call.1} parent=39 // pred_check
          %p300 = pneg %p52
        $region42: #{tpu_custom_call.1} parent=39 // pred_check_branch
          %302 = sbr.rel (%p300) target = $region44
        $region43: #{tpu_custom_call.1} parent=39 // pred_region
          %303 = dma.done %s296, 512
        $region44: #{tpu_custom_call.1} parent=39 // pred_fallthru
          _
        %s304 = sand.u32 %s31, 1
        %s305 = scalar_lea.sflag [#allocation7], %s304
        %s306 = sand.u32 %s67, 1
        %s307 = smul.addr %s306, 32
        %s308 = scalar_lea.vmem [#allocation6], %s307
        // Predicated region
        $region45: #{tpu_custom_call.1} parent=39 // pred_check
          %p309 = pneg %p80
        $region46: #{tpu_custom_call.1} parent=39 // pred_check_branch
          %311 = sbr.rel (%p309) target = $region48
        $region47: #{tpu_custom_call.1} parent=39 // pred_region
          %312 = dma.done %s305, 512
        $region48: #{tpu_custom_call.1} parent=39 // pred_fallthru
          _
        // Predicated region
        $region49: #{tpu_custom_call.1} parent=39 // pred_check
          %p313 = pneg %p101
        $region50: #{tpu_custom_call.1} parent=39 // pred_check_branch
          %315 = sbr.rel (%p313) target = $region52
        $region51: #{tpu_custom_call.1} parent=39 // pred_region
          %316 = dma.done [#allocation7], 256
        $region52: #{tpu_custom_call.1} parent=39 // pred_fallthru
          _
        // Predicated region
        $region53: #{tpu_custom_call.1} parent=39 // pred_check
          %p317 = pneg %p122
        $region54: #{tpu_custom_call.1} parent=39 // pred_check_branch
          %319 = sbr.rel (%p317) target = $region56
        $region55: #{tpu_custom_call.1} parent=39 // pred_region
          %320 = dma.done [#allocation10], 512
        $region56: #{tpu_custom_call.1} parent=39 // pred_fallthru
          _
        %s321 = sand.u32 %s39, 1
        %s322 = scalar_lea.sflag [#allocation4], %s321
        %s323 = sand.u32 %s39, 1
        %s324 = smul.addr %s323, 32
        %s325 = scalar_lea.vmem [#allocation3], %s324
        %p326 = pneg %p52
        %p327 = pneg %p49
        %s328 = sand.u32 %s31, 1
        %s329 = scalar_lea.sflag [#allocation7], %s328
        %s330 = sand.u32 %s67, 1
        %s331 = smul.addr %s330, 32
        %s332 = scalar_lea.vmem [#allocation6], %s331
        %p333 = pneg %p80
        %p334 = pneg %p77
        %p335 = pneg %p101
        %p336 = pneg %p98
        %p337 = pneg %p122
        %p338 = pneg %p119
        %p339 = pneg %p143
        %p340 = pneg %p140
        %p341 = pneg %p169
        %p342 = pneg %p166
        %s343 = sand.u32 %s156, 1
        %s344 = scalar_lea.sflag [#allocation5], %s343
        %s345 = sand.u32 %s156, 1
        %s346 = smul.addr %s345, 32
        %s347 = scalar_lea.vmem [#allocation11], %s346
        %p348 = pneg %p197
        %p349 = pneg %p194
        %s350 = sand.u32 %s184, 1
        %s351 = scalar_lea.sflag [#allocation13], %s350
        %s352 = sand.u32 %s184, 1
        %s353 = smul.addr %s352, 32
        %s354 = scalar_lea.vmem [#allocation12], %s353
        %s355 = smul.u32 4, %s31
        %s356 = ssub.s32 1, %s31
        %s357 = smul.u32 4, %s356
        %s358 = smul.u32 4, %s31
        %s359 = ssub.s32 1, %s31
        %s360 = smul.u32 4, %s359
        %p362 = scmp.eq.s32.totalorder %s31, 0
        // Predicated region
        $region57: #{tpu_custom_call.1} parent=39 // pred_check
          %p363 = pneg %p362
        $region58: #{tpu_custom_call.1} parent=39 // pred_check_branch
          %365 = sbr.rel (%p363) target = $region60
        $region59: #{tpu_custom_call.1} parent=39 // pred_region
          %vm366 = vcmask 261120
          %367 = vst.msk [vmem:[#allocation2] sm:$0xff] %vm366, 0.0
          %368 = vst.msk [vmem:[#allocation2 + $0x8] sm:$0xff] %vm366, 0.0
        $region60: #{tpu_custom_call.1} parent=39 // pred_fallthru
          _
        %v369 = vld [vmem:[%s299] sm:$0xff]
        %v370 = vld [vmem:[%s299 + $0x8] sm:$0xff]
        %v371 = vld [vmem:[%s299 + $0x10] sm:$0xff]
        %v372 = vld [vmem:[%s299 + $0x18] sm:$0xff]
        %v373 = vpack.c.bf16 %v370, %v369
        %v374 = vpack.c.bf16 %v372, %v371
        %v375 = vld [vmem:[%s308] sm:$0xff]
        %v376 = vld [vmem:[%s308 + $0x8] sm:$0xff]
        %v377 = vld [vmem:[%s308 + $0x10] sm:$0xff]
        %v378 = vld [vmem:[%s308 + $0x18] sm:$0xff]
        %v379 = vpack.c.bf16 %v376, %v375
        %v380 = vpack.c.bf16 %v378, %v377
        %v381 = vld [vmem:[#allocation8] sm:$0xf]
        %v382 = vld [vmem:[#allocation8 + $0x4] sm:$0xf]
        %v383 = vld [vmem:[%s4] sm:$0x1]
        %v385 = vlaneseq
        %v386 = vshrl.u32 %v385, 7
        %v387 = vsub.s32 0, %v386
        %v388 = vrot.slane %v383, %v387
        %v392 = vunpack.c.l.b16 %v381
        %v393 = vunpack.c.l.b16 %v382
        %v394 = vpack.c.b16 %v393, %v392
        %vm396 = vcmask 130048
        %v398 = vsel %vm396, %v373, 0
        %v401 = vsel %vm396, %v374, 0
        %403 = vmatprep.subr.bf16.mxu0 0
        %404 = vmatpush1.bf16.msra.mxu0 %v394
        %405 = vmatprep.subr.bf16.mxu0 0
        %406 = vmatpush1.bf16.msra.mxu0 0
        %407 = vmatprep.subr.bf16.mxu0 0
        %408 = vmatpush1.bf16.msra.mxu0 0
        %409 = vmatprep.subr.bf16.mxu0 0
        %410 = vmatpush1.bf16.msra.mxu0 0
        %411 = vmatprep.subr.bf16.mxu0 0
        %412 = vmatpush1.bf16.msra.mxu0 0
        %413 = vmatprep.subr.bf16.mxu0 0
        %414 = vmatpush1.bf16.msra.mxu0 0
        %415 = vmatprep.subr.bf16.mxu0 0
        %416 = vmatpush1.bf16.msra.mxu0 0
        %417 = vmatprep.subr.bf16.mxu0 0
        %418 = vmatpush1.bf16.msra.mxu0 0
        %419 = vmatprep.subr.bf16.mxu0 0
        %420 = vmatpush1.bf16.msra.mxu0 0
        %421 = vmatprep.subr.bf16.mxu0 0
        %422 = vmatpush1.bf16.msra.mxu0 0
        %423 = vmatprep.subr.bf16.mxu0 0
        %424 = vmatpush1.bf16.msra.mxu0 0
        %425 = vmatprep.subr.bf16.mxu0 0
        %426 = vmatpush1.bf16.msra.mxu0 0
        %427 = vmatprep.subr.bf16.mxu0 0
        %428 = vmatpush1.bf16.msra.mxu0 0
        %429 = vmatprep.subr.bf16.mxu0 0
        %430 = vmatpush1.bf16.msra.mxu0 0
        %431 = vmatprep.subr.bf16.mxu0 0
        %432 = vmatpush1.bf16.msra.mxu0 0
        %433 = vmatprep.subr.bf16.mxu0 0
        %434 = vmatpush1.bf16.msra.mxu0 0
        %435 = vmatprep.mubr.bf16.mxu0 0
        %436 = vmatmul.mubr.bf16.gmra.mrb[0].mxu0 %v398
        %v437 = vpop.f32.mrb[0].mxu0
        %v438 = vadd.f32 %v388, %v437
        %v439 = vpop.f32.mrb[0].mxu0
        %v440 = vpop.f32.mrb[0].mxu0
        %v441 = vadd.f32 %v388, %v440
        %v442 = vpop.f32.mrb[0].mxu0
        %443 = vmatprep.mubr.bf16.mxu0 0
        %444 = vmatmul.mubr.bf16.gmra.mrb[0].mxu0 %v401
        %v445 = vpop.f32.mrb[0].mxu0
        %v446 = vadd.f32 %v388, %v445
        %v447 = vpop.f32.mrb[0].mxu0
        %v448 = vpop.f32.mrb[0].mxu0
        %v449 = vadd.f32 %v388, %v448
        %v450 = vpop.f32.mrb[0].mxu0
        %451 = vdwg.mxu0
        %s452 = scalar_lea.vmem [#allocation8], 8
        %v453 = vld [vmem:[%s452] sm:$0xf]
        %v454 = vld [vmem:[%s452 + $0x4] sm:$0xf]
        %s455 = scalar_lea.vmem %s4, 1
        %v456 = vld [vmem:[%s455] sm:$0x1]
        %v458 = vlaneseq
        %v459 = vshrl.u32 %v458, 7
        %v460 = vsub.s32 0, %v459
        %v461 = vrot.slane %v456, %v460
        %v465 = vunpack.c.l.b16 %v453
        %v466 = vunpack.c.l.b16 %v454
        %v467 = vpack.c.b16 %v466, %v465
        %v470 = vsel %vm396, %v379, 0
        %v473 = vsel %vm396, %v380, 0
        %475 = vmatprep.subr.bf16.mxu0 0
        %476 = vmatpush1.bf16.msra.mxu0 %v467
        %477 = vmatprep.subr.bf16.mxu0 0
        %478 = vmatpush1.bf16.msra.mxu0 0
        %479 = vmatprep.subr.bf16.mxu0 0
        %480 = vmatpush1.bf16.msra.mxu0 0
        %481 = vmatprep.subr.bf16.mxu0 0
        %482 = vmatpush1.bf16.msra.mxu0 0
        %483 = vmatprep.subr.bf16.mxu0 0
        %484 = vmatpush1.bf16.msra.mxu0 0
        %485 = vmatprep.subr.bf16.mxu0 0
        %486 = vmatpush1.bf16.msra.mxu0 0
        %487 = vmatprep.subr.bf16.mxu0 0
        %488 = vmatpush1.bf16.msra.mxu0 0
        %489 = vmatprep.subr.bf16.mxu0 0
        %490 = vmatpush1.bf16.msra.mxu0 0
        %491 = vmatprep.subr.bf16.mxu0 0
        %492 = vmatpush1.bf16.msra.mxu0 0
        %493 = vmatprep.subr.bf16.mxu0 0
        %494 = vmatpush1.bf16.msra.mxu0 0
        %495 = vmatprep.subr.bf16.mxu0 0
        %496 = vmatpush1.bf16.msra.mxu0 0
        %497 = vmatprep.subr.bf16.mxu0 0
        %498 = vmatpush1.bf16.msra.mxu0 0
        %499 = vmatprep.subr.bf16.mxu0 0
        %500 = vmatpush1.bf16.msra.mxu0 0
        %501 = vmatprep.subr.bf16.mxu0 0
        %502 = vmatpush1.bf16.msra.mxu0 0
        %503 = vmatprep.subr.bf16.mxu0 0
        %504 = vmatpush1.bf16.msra.mxu0 0
        %505 = vmatprep.subr.bf16.mxu0 0
        %506 = vmatpush1.bf16.msra.mxu0 0
        %507 = vmatprep.mubr.bf16.mxu0 0
        %508 = vmatmul.mubr.bf16.gmra.mrb[0].mxu0 %v470
        %v509 = vpop.f32.mrb[0].mxu0
        %v510 = vadd.f32 %v461, %v509
        %v511 = vpop.f32.mrb[0].mxu0
        %v512 = vpop.f32.mrb[0].mxu0
        %v513 = vadd.f32 %v461, %v512
        %v514 = vpop.f32.mrb[0].mxu0
        %515 = vmatprep.mubr.bf16.mxu0 0
        %516 = vmatmul.mubr.bf16.gmra.mrb[0].mxu0 %v473
        %v517 = vpop.f32.mrb[0].mxu0
        %v518 = vadd.f32 %v461, %v517
        %v519 = vpop.f32.mrb[0].mxu0
        %v520 = vpop.f32.mrb[0].mxu0
        %v521 = vadd.f32 %v461, %v520
        %v522 = vpop.f32.mrb[0].mxu0
        %523 = vdwg.mxu0
        %vm524 = vcmask 261120
        %525 = vst.msk [vmem:[%s347] sm:$0xff] %vm524, %v438
        %526 = vst.msk [vmem:[%s347 + $0x8] sm:$0xff] %vm524, %v441
        %527 = vst.msk [vmem:[%s347 + $0x10] sm:$0xff] %vm524, %v446
        %528 = vst.msk [vmem:[%s347 + $0x18] sm:$0xff] %vm524, %v449
        %529 = vst.msk [vmem:[%s354] sm:$0xff] %vm524, %v510
        %530 = vst.msk [vmem:[%s354 + $0x8] sm:$0xff] %vm524, %v513
        %531 = vst.msk [vmem:[%s354 + $0x10] sm:$0xff] %vm524, %v518
        %532 = vst.msk [vmem:[%s354 + $0x18] sm:$0xff] %vm524, %v521
        %v533 = vld [vmem:[#allocation9] sm:$0xf]
        %v534 = vld [vmem:[#allocation9 + $0x4] sm:$0xf]
        %v535 = vld [vmem:[#allocation9 + $0x8] sm:$0xf]
        %v536 = vld [vmem:[#allocation9 + $0xc] sm:$0xf]
        %s537 = scalar_lea.vmem [#allocation9], 16
        %v538 = vld [vmem:[%s537] sm:$0xf]
        %v539 = vld [vmem:[%s537 + $0x4] sm:$0xf]
        %v540 = vld [vmem:[%s537 + $0x8] sm:$0xf]
        %v541 = vld [vmem:[%s537 + $0xc] sm:$0xf]
        %v542 = vld [vmem:[#allocation2] sm:$0xff]
        %s543 = scalar_lea.vmem [#allocation2], 8
        %v544 = vld [vmem:[%s543] sm:$0xff]
        %v545 = vpack.c.bf16 %v542, %v542
        %v550 = vunpack.c.l.b16 %v533
        %v551 = vunpack.c.l.b16 %v534
        %v552 = vunpack.c.l.b16 %v535
        %v553 = vunpack.c.l.b16 %v536
        %v554 = vpack.c.b16 %v551, %v550
        %v555 = vpack.c.b16 %v553, %v552
        %v559 = vsel %vm524, %v545, 0
        %561 = vmatprep.subr.bf16.mxu0 0
        %562 = vmatpush1.bf16.msra.mxu0 %v554
        %563 = vmatprep.subr.bf16.mxu0 0
        %564 = vmatpush1.bf16.msra.mxu0 %v555
        %565 = vmatprep.subr.bf16.mxu0 0
        %566 = vmatpush1.bf16.msra.mxu0 0
        %567 = vmatprep.subr.bf16.mxu0 0
        %568 = vmatpush1.bf16.msra.mxu0 0
        %569 = vmatprep.subr.bf16.mxu0 0
        %570 = vmatpush1.bf16.msra.mxu0 0
        %571 = vmatprep.subr.bf16.mxu0 0
        %572 = vmatpush1.bf16.msra.mxu0 0
        %573 = vmatprep.subr.bf16.mxu0 0
        %574 = vmatpush1.bf16.msra.mxu0 0
        %575 = vmatprep.subr.bf16.mxu0 0
        %576 = vmatpush1.bf16.msra.mxu0 0
        %577 = vmatprep.subr.bf16.mxu0 0
        %578 = vmatpush1.bf16.msra.mxu0 0
        %579 = vmatprep.subr.bf16.mxu0 0
        %580 = vmatpush1.bf16.msra.mxu0 0
        %581 = vmatprep.subr.bf16.mxu0 0
        %582 = vmatpush1.bf16.msra.mxu0 0
        %583 = vmatprep.subr.bf16.mxu0 0
        %584 = vmatpush1.bf16.msra.mxu0 0
        %585 = vmatprep.subr.bf16.mxu0 0
        %586 = vmatpush1.bf16.msra.mxu0 0
        %587 = vmatprep.subr.bf16.mxu0 0
        %588 = vmatpush1.bf16.msra.mxu0 0
        %589 = vmatprep.subr.bf16.mxu0 0
        %590 = vmatpush1.bf16.msra.mxu0 0
        %591 = vmatprep.subr.bf16.mxu0 0
        %592 = vmatpush1.bf16.msra.mxu0 0
        %593 = vmatprep.mubr.bf16.mxu0 0
        %594 = vmatmul.mubr.bf16.gmra.mrb[0].mxu0 %v559
        %v595 = vpop.f32.mrb[0].mxu0
        %v596 = vadd.f32 0.0, %v595
        %v597 = vpop.f32.mrb[0].mxu0
        %v598 = vpop.f32.mrb[0].mxu0
        %v599 = vpop.f32.mrb[0].mxu0
        %600 = vdwg.mxu0
        %v601 = vpack.c.bf16 %v544, %v544
        %v606 = vunpack.c.l.b16 %v538
        %v607 = vunpack.c.l.b16 %v539
        %v608 = vunpack.c.l.b16 %v540
        %v609 = vunpack.c.l.b16 %v541
        %v610 = vpack.c.b16 %v607, %v606
        %v611 = vpack.c.b16 %v609, %v608
        %v615 = vsel %vm524, %v601, 0
        %617 = vmatprep.subr.bf16.mxu0 0
        %618 = vmatpush1.bf16.msra.mxu0 %v610
        %619 = vmatprep.subr.bf16.mxu0 0
        %620 = vmatpush1.bf16.msra.mxu0 %v611
        %621 = vmatprep.subr.bf16.mxu0 0
        %622 = vmatpush1.bf16.msra.mxu0 0
        %623 = vmatprep.subr.bf16.mxu0 0
        %624 = vmatpush1.bf16.msra.mxu0 0
        %625 = vmatprep.subr.bf16.mxu0 0
        %626 = vmatpush1.bf16.msra.mxu0 0
        %627 = vmatprep.subr.bf16.mxu0 0
        %628 = vmatpush1.bf16.msra.mxu0 0
        %629 = vmatprep.subr.bf16.mxu0 0
        %630 = vmatpush1.bf16.msra.mxu0 0
        %631 = vmatprep.subr.bf16.mxu0 0
        %632 = vmatpush1.bf16.msra.mxu0 0
        %633 = vmatprep.subr.bf16.mxu0 0
        %634 = vmatpush1.bf16.msra.mxu0 0
        %635 = vmatprep.subr.bf16.mxu0 0
        %636 = vmatpush1.bf16.msra.mxu0 0
        %637 = vmatprep.subr.bf16.mxu0 0
        %638 = vmatpush1.bf16.msra.mxu0 0
        %639 = vmatprep.subr.bf16.mxu0 0
        %640 = vmatpush1.bf16.msra.mxu0 0
        %641 = vmatprep.subr.bf16.mxu0 0
        %642 = vmatpush1.bf16.msra.mxu0 0
        %643 = vmatprep.subr.bf16.mxu0 0
        %644 = vmatpush1.bf16.msra.mxu0 0
        %645 = vmatprep.subr.bf16.mxu0 0
        %646 = vmatpush1.bf16.msra.mxu0 0
        %647 = vmatprep.subr.bf16.mxu0 0
        %648 = vmatpush1.bf16.msra.mxu0 0
        %649 = vmatprep.mubr.bf16.mxu0 0
        %650 = vmatmul.mubr.bf16.gmra.mrb[0].mxu0 %v615
        %v651 = vpop.f32.mrb[0].mxu0
        %v652 = vadd.f32 0.0, %v651
        %v653 = vpop.f32.mrb[0].mxu0
        %v654 = vpop.f32.mrb[0].mxu0
        %v655 = vpop.f32.mrb[0].mxu0
        %656 = vdwg.mxu0
        %v657 = vld [vmem:[%s347] sm:$0xff]
        %v658 = vadd.f32 %v657, %v596
        %v659 = vtanh.pop %v658
        %s660 = scalar_lea.vmem %s354, 24 [#allocation12]
        %v661 = vld [vmem:[%s660] sm:$0xff]
        %v662 = vadd.f32 %v661, %v652
        %v663 = vtanh.pop %v662
        %664 = vst.msk [vmem:[%s347] sm:$0xff] %vm524, %v659
        %665 = vst.msk [vmem:[%s660] sm:$0xff] %vm524, %v663
        %v666 = vpack.c.bf16 %v659, %v659
        %v668 = vsel %vm524, %v666, 0
        %670 = vmatprep.subr.bf16.mxu0 0
        %671 = vmatpush1.bf16.msra.mxu0 %v554
        %672 = vmatprep.subr.bf16.mxu0 0
        %673 = vmatpush1.bf16.msra.mxu0 %v555
        %674 = vmatprep.subr.bf16.mxu0 0
        %675 = vmatpush1.bf16.msra.mxu0 0
        %676 = vmatprep.subr.bf16.mxu0 0
        %677 = vmatpush1.bf16.msra.mxu0 0
        %678 = vmatprep.subr.bf16.mxu0 0
        %679 = vmatpush1.bf16.msra.mxu0 0
        %680 = vmatprep.subr.bf16.mxu0 0
        %681 = vmatpush1.bf16.msra.mxu0 0
        %682 = vmatprep.subr.bf16.mxu0 0
        %683 = vmatpush1.bf16.msra.mxu0 0
        %684 = vmatprep.subr.bf16.mxu0 0
        %685 = vmatpush1.bf16.msra.mxu0 0
        %686 = vmatprep.subr.bf16.mxu0 0
        %687 = vmatpush1.bf16.msra.mxu0 0
        %688 = vmatprep.subr.bf16.mxu0 0
        %689 = vmatpush1.bf16.msra.mxu0 0
        %690 = vmatprep.subr.bf16.mxu0 0
        %691 = vmatpush1.bf16.msra.mxu0 0
        %692 = vmatprep.subr.bf16.mxu0 0
        %693 = vmatpush1.bf16.msra.mxu0 0
        %694 = vmatprep.subr.bf16.mxu0 0
        %695 = vmatpush1.bf16.msra.mxu0 0
        %696 = vmatprep.subr.bf16.mxu0 0
        %697 = vmatpush1.bf16.msra.mxu0 0
        %698 = vmatprep.subr.bf16.mxu0 0
        %699 = vmatpush1.bf16.msra.mxu0 0
        %700 = vmatprep.subr.bf16.mxu0 0
        %701 = vmatpush1.bf16.msra.mxu0 0
        %702 = vmatprep.mubr.bf16.mxu0 0
        %703 = vmatmul.mubr.bf16.gmra.mrb[0].mxu0 %v668
        %v704 = vpop.f32.mrb[0].mxu0
        %v705 = vadd.f32 0.0, %v704
        %v706 = vpop.f32.mrb[0].mxu0
        %v707 = vpop.f32.mrb[0].mxu0
        %v708 = vpop.f32.mrb[0].mxu0
        %709 = vdwg.mxu0
        %v710 = vpack.c.bf16 %v663, %v663
        %v712 = vsel %vm524, %v710, 0
        %714 = vmatprep.subr.bf16.mxu0 0
        %715 = vmatpush1.bf16.msra.mxu0 %v610
        %716 = vmatprep.subr.bf16.mxu0 0
        %717 = vmatpush1.bf16.msra.mxu0 %v611
        %718 = vmatprep.subr.bf16.mxu0 0
        %719 = vmatpush1.bf16.msra.mxu0 0
        %720 = vmatprep.subr.bf16.mxu0 0
        %721 = vmatpush1.bf16.msra.mxu0 0
        %722 = vmatprep.subr.bf16.mxu0 0
        %723 = vmatpush1.bf16.msra.mxu0 0
        %724 = vmatprep.subr.bf16.mxu0 0
        %725 = vmatpush1.bf16.msra.mxu0 0
        %726 = vmatprep.subr.bf16.mxu0 0
        %727 = vmatpush1.bf16.msra.mxu0 0
        %728 = vmatprep.subr.bf16.mxu0 0
        %729 = vmatpush1.bf16.msra.mxu0 0
        %730 = vmatprep.subr.bf16.mxu0 0
        %731 = vmatpush1.bf16.msra.mxu0 0
        %732 = vmatprep.subr.bf16.mxu0 0
        %733 = vmatpush1.bf16.msra.mxu0 0
        %734 = vmatprep.subr.bf16.mxu0 0
        %735 = vmatpush1.bf16.msra.mxu0 0
        %736 = vmatprep.subr.bf16.mxu0 0
        %737 = vmatpush1.bf16.msra.mxu0 0
        %738 = vmatprep.subr.bf16.mxu0 0
        %739 = vmatpush1.bf16.msra.mxu0 0
        %740 = vmatprep.subr.bf16.mxu0 0
        %741 = vmatpush1.bf16.msra.mxu0 0
        %742 = vmatprep.subr.bf16.mxu0 0
        %743 = vmatpush1.bf16.msra.mxu0 0
        %744 = vmatprep.subr.bf16.mxu0 0
        %745 = vmatpush1.bf16.msra.mxu0 0
        %746 = vmatprep.mubr.bf16.mxu0 0
        %747 = vmatmul.mubr.bf16.gmra.mrb[0].mxu0 %v712
        %v748 = vpop.f32.mrb[0].mxu0
        %v749 = vadd.f32 0.0, %v748
        %v750 = vpop.f32.mrb[0].mxu0
        %v751 = vpop.f32.mrb[0].mxu0
        %v752 = vpop.f32.mrb[0].mxu0
        %753 = vdwg.mxu0
        %s754 = scalar_lea.vmem %s347, 8 [#allocation11]
        %v755 = vld [vmem:[%s754] sm:$0xff]
        %v756 = vadd.f32 %v755, %v705
        %v757 = vtanh.pop %v756
        %s758 = scalar_lea.vmem %s354, 16 [#allocation12]
        %v759 = vld [vmem:[%s758] sm:$0xff]
        %v760 = vadd.f32 %v759, %v749
        %v761 = vtanh.pop %v760
        %762 = vst.msk [vmem:[%s754] sm:$0xff] %vm524, %v757
        %763 = vst.msk [vmem:[%s758] sm:$0xff] %vm524, %v761
        %v764 = vpack.c.bf16 %v757, %v757
        %v766 = vsel %vm524, %v764, 0
        %768 = vmatprep.subr.bf16.mxu0 0
        %769 = vmatpush1.bf16.msra.mxu0 %v554
        %770 = vmatprep.subr.bf16.mxu0 0
        %771 = vmatpush1.bf16.msra.mxu0 %v555
        %772 = vmatprep.subr.bf16.mxu0 0
        %773 = vmatpush1.bf16.msra.mxu0 0
        %774 = vmatprep.subr.bf16.mxu0 0
        %775 = vmatpush1.bf16.msra.mxu0 0
        %776 = vmatprep.subr.bf16.mxu0 0
        %777 = vmatpush1.bf16.msra.mxu0 0
        %778 = vmatprep.subr.bf16.mxu0 0
        %779 = vmatpush1.bf16.msra.mxu0 0
        %780 = vmatprep.subr.bf16.mxu0 0
        %781 = vmatpush1.bf16.msra.mxu0 0
        %782 = vmatprep.subr.bf16.mxu0 0
        %783 = vmatpush1.bf16.msra.mxu0 0
        %784 = vmatprep.subr.bf16.mxu0 0
        %785 = vmatpush1.bf16.msra.mxu0 0
        %786 = vmatprep.subr.bf16.mxu0 0
        %787 = vmatpush1.bf16.msra.mxu0 0
        %788 = vmatprep.subr.bf16.mxu0 0
        %789 = vmatpush1.bf16.msra.mxu0 0
        %790 = vmatprep.subr.bf16.mxu0 0
        %791 = vmatpush1.bf16.msra.mxu0 0
        %792 = vmatprep.subr.bf16.mxu0 0
        %793 = vmatpush1.bf16.msra.mxu0 0
        %794 = vmatprep.subr.bf16.mxu0 0
        %795 = vmatpush1.bf16.msra.mxu0 0
        %796 = vmatprep.subr.bf16.mxu0 0
        %797 = vmatpush1.bf16.msra.mxu0 0
        %798 = vmatprep.subr.bf16.mxu0 0
        %799 = vmatpush1.bf16.msra.mxu0 0
        %800 = vmatprep.mubr.bf16.mxu0 0
        %801 = vmatmul.mubr.bf16.gmra.mrb[0].mxu0 %v766
        %v802 = vpop.f32.mrb[0].mxu0
        %v803 = vadd.f32 0.0, %v802
        %v804 = vpop.f32.mrb[0].mxu0
        %v805 = vpop.f32.mrb[0].mxu0
        %v806 = vpop.f32.mrb[0].mxu0
        %807 = vdwg.mxu0
        %v808 = vpack.c.bf16 %v761, %v761
        %v810 = vsel %vm524, %v808, 0
        %812 = vmatprep.subr.bf16.mxu0 0
        %813 = vmatpush1.bf16.msra.mxu0 %v610
        %814 = vmatprep.subr.bf16.mxu0 0
        %815 = vmatpush1.bf16.msra.mxu0 %v611
        %816 = vmatprep.subr.bf16.mxu0 0
        %817 = vmatpush1.bf16.msra.mxu0 0
        %818 = vmatprep.subr.bf16.mxu0 0
        %819 = vmatpush1.bf16.msra.mxu0 0
        %820 = vmatprep.subr.bf16.mxu0 0
        %821 = vmatpush1.bf16.msra.mxu0 0
        %822 = vmatprep.subr.bf16.mxu0 0
        %823 = vmatpush1.bf16.msra.mxu0 0
        %824 = vmatprep.subr.bf16.mxu0 0
        %825 = vmatpush1.bf16.msra.mxu0 0
        %826 = vmatprep.subr.bf16.mxu0 0
        %827 = vmatpush1.bf16.msra.mxu0 0
        %828 = vmatprep.subr.bf16.mxu0 0
        %829 = vmatpush1.bf16.msra.mxu0 0
        %830 = vmatprep.subr.bf16.mxu0 0
        %831 = vmatpush1.bf16.msra.mxu0 0
        %832 = vmatprep.subr.bf16.mxu0 0
        %833 = vmatpush1.bf16.msra.mxu0 0
        %834 = vmatprep.subr.bf16.mxu0 0
        %835 = vmatpush1.bf16.msra.mxu0 0
        %836 = vmatprep.subr.bf16.mxu0 0
        %837 = vmatpush1.bf16.msra.mxu0 0
        %838 = vmatprep.subr.bf16.mxu0 0
        %839 = vmatpush1.bf16.msra.mxu0 0
        %840 = vmatprep.subr.bf16.mxu0 0
        %841 = vmatpush1.bf16.msra.mxu0 0
        %842 = vmatprep.subr.bf16.mxu0 0
        %843 = vmatpush1.bf16.msra.mxu0 0
        %844 = vmatprep.mubr.bf16.mxu0 0
        %845 = vmatmul.mubr.bf16.gmra.mrb[0].mxu0 %v810
        %v846 = vpop.f32.mrb[0].mxu0
        %v847 = vadd.f32 0.0, %v846
        %v848 = vpop.f32.mrb[0].mxu0
        %v849 = vpop.f32.mrb[0].mxu0
        %v850 = vpop.f32.mrb[0].mxu0
        %851 = vdwg.mxu0
        %s852 = scalar_lea.vmem %s347, 16 [#allocation11]
        %v853 = vld [vmem:[%s852] sm:$0xff]
        %v854 = vadd.f32 %v853, %v803
        %v855 = vtanh.pop %v854
        %s856 = scalar_lea.vmem %s354, 8 [#allocation12]
        %v857 = vld [vmem:[%s856] sm:$0xff]
        %v858 = vadd.f32 %v857, %v847
        %v859 = vtanh.pop %v858
        %860 = vst.msk [vmem:[%s852] sm:$0xff] %vm524, %v855
        %861 = vst.msk [vmem:[%s856] sm:$0xff] %vm524, %v859
        %v862 = vpack.c.bf16 %v855, %v855
        %v864 = vsel %vm524, %v862, 0
        %866 = vmatprep.subr.bf16.mxu0 0
        %867 = vmatpush1.bf16.msra.mxu0 %v554
        %868 = vmatprep.subr.bf16.mxu0 0
        %869 = vmatpush1.bf16.msra.mxu0 %v555
        %870 = vmatprep.subr.bf16.mxu0 0
        %871 = vmatpush1.bf16.msra.mxu0 0
        %872 = vmatprep.subr.bf16.mxu0 0
        %873 = vmatpush1.bf16.msra.mxu0 0
        %874 = vmatprep.subr.bf16.mxu0 0
        %875 = vmatpush1.bf16.msra.mxu0 0
        %876 = vmatprep.subr.bf16.mxu0 0
        %877 = vmatpush1.bf16.msra.mxu0 0
        %878 = vmatprep.subr.bf16.mxu0 0
        %879 = vmatpush1.bf16.msra.mxu0 0
        %880 = vmatprep.subr.bf16.mxu0 0
        %881 = vmatpush1.bf16.msra.mxu0 0
        %882 = vmatprep.subr.bf16.mxu0 0
        %883 = vmatpush1.bf16.msra.mxu0 0
        %884 = vmatprep.subr.bf16.mxu0 0
        %885 = vmatpush1.bf16.msra.mxu0 0
        %886 = vmatprep.subr.bf16.mxu0 0
        %887 = vmatpush1.bf16.msra.mxu0 0
        %888 = vmatprep.subr.bf16.mxu0 0
        %889 = vmatpush1.bf16.msra.mxu0 0
        %890 = vmatprep.subr.bf16.mxu0 0
        %891 = vmatpush1.bf16.msra.mxu0 0
        %892 = vmatprep.subr.bf16.mxu0 0
        %893 = vmatpush1.bf16.msra.mxu0 0
        %894 = vmatprep.subr.bf16.mxu0 0
        %895 = vmatpush1.bf16.msra.mxu0 0
        %896 = vmatprep.subr.bf16.mxu0 0
        %897 = vmatpush1.bf16.msra.mxu0 0
        %898 = vmatprep.mubr.bf16.mxu0 0
        %899 = vmatmul.mubr.bf16.gmra.mrb[0].mxu0 %v864
        %v900 = vpop.f32.mrb[0].mxu0
        %v901 = vadd.f32 0.0, %v900
        %v902 = vpop.f32.mrb[0].mxu0
        %v903 = vpop.f32.mrb[0].mxu0
        %v904 = vpop.f32.mrb[0].mxu0
        %905 = vdwg.mxu0
        %v906 = vpack.c.bf16 %v859, %v859
        %v908 = vsel %vm524, %v906, 0
        %910 = vmatprep.subr.bf16.mxu0 0
        %911 = vmatpush1.bf16.msra.mxu0 %v610
        %912 = vmatprep.subr.bf16.mxu0 0
        %913 = vmatpush1.bf16.msra.mxu0 %v611
        %914 = vmatprep.subr.bf16.mxu0 0
        %915 = vmatpush1.bf16.msra.mxu0 0
        %916 = vmatprep.subr.bf16.mxu0 0
        %917 = vmatpush1.bf16.msra.mxu0 0
        %918 = vmatprep.subr.bf16.mxu0 0
        %919 = vmatpush1.bf16.msra.mxu0 0
        %920 = vmatprep.subr.bf16.mxu0 0
        %921 = vmatpush1.bf16.msra.mxu0 0
        %922 = vmatprep.subr.bf16.mxu0 0
        %923 = vmatpush1.bf16.msra.mxu0 0
        %924 = vmatprep.subr.bf16.mxu0 0
        %925 = vmatpush1.bf16.msra.mxu0 0
        %926 = vmatprep.subr.bf16.mxu0 0
        %927 = vmatpush1.bf16.msra.mxu0 0
        %928 = vmatprep.subr.bf16.mxu0 0
        %929 = vmatpush1.bf16.msra.mxu0 0
        %930 = vmatprep.subr.bf16.mxu0 0
        %931 = vmatpush1.bf16.msra.mxu0 0
        %932 = vmatprep.subr.bf16.mxu0 0
        %933 = vmatpush1.bf16.msra.mxu0 0
        %934 = vmatprep.subr.bf16.mxu0 0
        %935 = vmatpush1.bf16.msra.mxu0 0
        %936 = vmatprep.subr.bf16.mxu0 0
        %937 = vmatpush1.bf16.msra.mxu0 0
        %938 = vmatprep.subr.bf16.mxu0 0
        %939 = vmatpush1.bf16.msra.mxu0 0
        %940 = vmatprep.subr.bf16.mxu0 0
        %941 = vmatpush1.bf16.msra.mxu0 0
        %942 = vmatprep.mubr.bf16.mxu0 0
        %943 = vmatmul.mubr.bf16.gmra.mrb[0].mxu0 %v908
        %v944 = vpop.f32.mrb[0].mxu0
        %v945 = vadd.f32 0.0, %v944
        %v946 = vpop.f32.mrb[0].mxu0
        %v947 = vpop.f32.mrb[0].mxu0
        %v948 = vpop.f32.mrb[0].mxu0
        %949 = vdwg.mxu0
        %s950 = scalar_lea.vmem %s347, 24 [#allocation11]
        %v951 = vld [vmem:[%s950] sm:$0xff]
        %v952 = vadd.f32 %v951, %v901
        %v953 = vtanh.pop %v952
        %v954 = vld [vmem:[%s354] sm:$0xff]
        %v955 = vadd.f32 %v954, %v945
        %v956 = vtanh.pop %v955
        %957 = vst.msk [vmem:[%s950] sm:$0xff] %vm524, %v953
        %958 = vst.msk [vmem:[%s354] sm:$0xff] %vm524, %v956
        %959 = vst.msk [vmem:[#allocation2] sm:$0xff] %vm524, %v953
        %960 = vst.msk [vmem:[%s543] sm:$0xff] %vm524, %v956
        %s961 = sand.u32 %s156, 1
        %s962 = scalar_lea.sflag [#allocation5], %s961
        %s963 = sand.u32 %s156, 1
        %s964 = smul.addr %s963, 32
        %s965 = scalar_lea.vmem [#allocation11], %s964
        %s966 = sand.u32 %s184, 1
        %s967 = scalar_lea.sflag [#allocation13], %s966
        %s968 = sand.u32 %s184, 1
        %s969 = smul.addr %s968, 32
        %s970 = scalar_lea.vmem [#allocation12], %s969
        // Predicated region
        $region61: #{tpu_custom_call.1} parent=39 // pred_check
          %p971 = pneg %p166
        $region62: #{tpu_custom_call.1} parent=39 // pred_check_branch
          %973 = sbr.rel (%p971) target = $region64
        $region63: #{tpu_custom_call.1} parent=39 // pred_region
          %s974 = smul.u32 4, %s31
          %s976 = ssub.s32 512, 512
          %977 = vsyncadd %s962, %s976
          %s978 = smul.addr %s974, 128
          %s979 = scalar_lea.hbm %s5, %s978
          %s980 = sshll.u32 %s965, 4
          %s981 = int_to_ptr.vmem [resolvable:$true] %s980
          %986 = dma.vmem_to_hbm [thread:$0]  %s981, 512, %s979, %s962, 128, 128, 8
        $region64: #{tpu_custom_call.1} parent=39 // pred_fallthru
          _
        // Predicated region
        $region65: #{tpu_custom_call.1} parent=39 // pred_check
          %p987 = pneg %p194
        $region66: #{tpu_custom_call.1} parent=39 // pred_check_branch
          %989 = sbr.rel (%p987) target = $region68
        $region67: #{tpu_custom_call.1} parent=39 // pred_region
          %s990 = ssub.s32 1, %s31
          %s991 = smul.u32 4, %s990
          %s993 = ssub.s32 512, 512
          %994 = vsyncadd %s967, %s993
          %s995 = smul.addr %s991, 128
          %s996 = scalar_lea.hbm %s6, %s995
          %s997 = sshll.u32 %s970, 4
          %s998 = int_to_ptr.vmem [resolvable:$true] %s997
          %1003 = dma.vmem_to_hbm [thread:$0]  %s998, 512, %s996, %s967, 128, 128, 8
        $region68: #{tpu_custom_call.1} parent=39 // pred_fallthru
          _
      $region40: #{tpu_custom_call.1} parent=5 // pred_fallthru
        _
      %p1004 = scmp.le.s32.totalorder 2, %s26
      // Predicated region
      $region69: #{tpu_custom_call.1} parent=5 // pred_check
        %p1005 = pneg %p1004
      $region70: #{tpu_custom_call.1} parent=5 // pred_check_branch
        %1007 = sbr.rel (%p1005) target = $region72
      $region71: #{tpu_custom_call.1} parent=5 // pred_region
        %s1008 = ssub.s32 %s26, 2
        // Predicated region
        $region73: #{tpu_custom_call.1} parent=71 // pred_check
          %p1009 = pneg %p172
        $region74: #{tpu_custom_call.1} parent=71 // pred_check_branch
          %1011 = sbr.rel (%p1009) target = $region76
        $region75: #{tpu_custom_call.1} parent=71 // pred_region
          %s1012 = sand.u32 %s157, 1
          %s1013 = scalar_lea.sflag [#allocation5], %s1012
          %s1014 = sand.u32 %s157, 1
          %s1015 = smul.addr %s1014, 32
          %s1016 = scalar_lea.vmem [#allocation11], %s1015
          %1017 = dma.done %s1013, 512
        $region76: #{tpu_custom_call.1} parent=71 // pred_fallthru
          _
        // Predicated region
        $region77: #{tpu_custom_call.1} parent=71 // pred_check
          %p1018 = pneg %p200
        $region78: #{tpu_custom_call.1} parent=71 // pred_check_branch
          %1020 = sbr.rel (%p1018) target = $region80
        $region79: #{tpu_custom_call.1} parent=71 // pred_region
          %s1021 = sand.u32 %s185, 1
          %s1022 = scalar_lea.sflag [#allocation13], %s1021
          %s1023 = sand.u32 %s185, 1
          %s1024 = smul.addr %s1023, 32
          %s1025 = scalar_lea.vmem [#allocation12], %s1024
          %1026 = dma.done %s1022, 512
        $region80: #{tpu_custom_call.1} parent=71 // pred_fallthru
          _
      $region72: #{tpu_custom_call.1} parent=5 // pred_fallthru
        _
    $region6: #{tpu_custom_call.1} parent=1 // loop_footer
      %s30 = sadd.s32 1, %s26
    $region7: #{tpu_custom_call.1} parent=1 // loop_footer_branch
      %25 = sbr.rel target = $region3
    $region8: #{tpu_custom_call.1} parent=1 // loop_exit
      _
    %1027 = vsyncpa [#allocation4], 1
    %s1028 = scalar_lea.sflag [#allocation4], 1
    %1029 = vsyncpa %s1028, 1
    %1030 = vsyncpa [#allocation7], 1
    %s1031 = scalar_lea.sflag [#allocation7], 1
    %1032 = vsyncpa %s1031, 1
    %1033 = vsyncpa [#allocation10], 1
    %1034 = vsyncpa [#allocation5], 1
    %s1035 = scalar_lea.sflag [#allocation5], 1
    %1036 = vsyncpa %s1035, 1
    %1037 = vsyncpa [#allocation13], 1
    %s1038 = scalar_lea.sflag [#allocation13], 1
    %1039 = vsyncpa %s1038, 1

</llo_original>
